<compile_context>
chip_gen: v6e
topology: v6e:2x2x1
jax: 0.10.0
libtpu: 0.0.40
codegen_flags: <defaults>
</compile_context>

<pallas_src>
import math

import jax
import jax.numpy as jnp
from jax import lax
from jax.experimental import pallas as pl
from jax.experimental.pallas import tpu as pltpu


def _round_up(x, mult):
    return ((x + mult - 1) // mult) * mult


def conv2d_untied_bias(x_nchw, weight_oihw, bias_chw, *, co_tile=None, nb=None,
                       mxu_dtype=None):
    """Pallas implementation of Conv2dUntiedBias.forward (stride=1, pad=0, groups=1).

    co_tile:   C_out tile height (default: full C_out -> weight/bias stay resident).
    nb:        images per grid step (default: heuristic, >=512 output lanes per step
               while keeping >=2 batch grid steps for v7x megacore when possible).
    mxu_dtype: optional MXU operand dtype (e.g. jnp.bfloat16 on v6e/v7x);
               accumulation stays f32.
    """
    n, c_in, h, w = x_nchw.shape
    c_out, c_in_w, kh, kw = weight_oihw.shape
    assert c_in_w == c_in
    h_out = h - kh + 1
    w_out = w - kw + 1
    m = h_out * w_out
    k = c_in * kh * kw
    assert bias_chw.shape == (c_out, 1, w_out)

    m_pad = _round_up(m, 128)                 # lane-dense per-image output width
    compute_dtype = jnp.dtype(mxu_dtype) if mxu_dtype is not None else x_nchw.dtype
    out_dtype = x_nchw.dtype

    if co_tile is None:
        co_tile = c_out                        # full MXU-height tile by default
    assert c_out % co_tile == 0
    assert co_tile % 8 == 0 or co_tile == c_out

    if nb is None:
        # Enough images per step to reach >=512 output lanes, but keep >=2 grid
        # steps along the batch axis (megacore sharding on v7x) when batch allows.
        nb = max(1, min(n, -(-512 // m_pad)))
        while nb > 1 and -(-n // nb) < 2:
            nb //= 2
    n_pad = _round_up(n, nb)
    if n_pad != n:
        x_nchw = jnp.pad(x_nchw, ((0, n_pad - n), (0, 0), (0, 0), (0, 0)))

    # ---- wrapper-side layout plumbing (glue, outside the kernel) ----
    # weight: OIHW -> (C_out, KH, KW, C_in) -> (C_out, K), with k = (i*KW + j)*C_in + ci
    w_mat = jnp.transpose(weight_oihw, (0, 2, 3, 1)).reshape(c_out, k)
    w_mat = w_mat.astype(compute_dtype)
    # Untied bias passed UNbroadcast: (C_out, W_out). Broadcast over H_out in-kernel.
    bias2d = bias_chw.reshape(c_out, w_out)

    c_tiles = c_out // co_tile
    grid = (n_pad // nb, c_tiles)             # batch axis slow/parallel, c axis fast/arbitrary

    def kernel(x_ref, w_ref, b_ref, o_ref, patch_ref):
        # x_ref: (nb, C_in, H, W)    w_ref: (co_tile, K)      b_ref: (co_tile, W_out)
        # o_ref: (nb, co_tile, M_pad)  patch_ref: VMEM (K, nb*M_pad), persists across grid steps.

        # Build the im2col patch once per image block, directly into the scratch
        # (no concat repack); reused across all C_out tiles (c axis is "arbitrary").
        @pl.when(pl.program_id(1) == 0)
        def _build_patch():
            patch_ref[...] = jnp.zeros_like(patch_ref)   # zero the lane padding once
            for b in range(nb):
                xb = x_ref[b]                            # (C_in, H, W), W on lanes
                col0 = b * m_pad
                for i in range(kh):
                    for j in range(kw):
                        # Row ordering (i, j, ci) matches w_mat's transpose/reshape above.
                        tap = xb[:, i:i + h_out, j:j + w_out].reshape(c_in, m)
                        patch_ref[pl.ds((i * kw + j) * c_in, c_in),
                                  pl.ds(col0, m)] = tap.astype(patch_ref.dtype)

        # Single deep MXU contraction for all nb images, f32 accumulation.
        acc = lax.dot_general(
            w_ref[...], patch_ref[...],
            dimension_numbers=(((1,), (0,)), ((), ())),
            preferred_element_type=jnp.float32)          # (co_tile, nb*M_pad)

        # Untied bias broadcast over H_out in-kernel (columns ordered h*W_out + w),
        # zero-padded to the lane-dense M_pad width.
        bias = b_ref[...].astype(jnp.float32)            # (co_tile, W_out)
        parts = [bias] * h_out
        if m_pad > m:
            parts.append(jnp.zeros((co_tile, m_pad - m), jnp.float32))
        bias_m = jnp.concatenate(parts, axis=1)          # (co_tile, M_pad)

        for b in range(nb):                              # unmasked (co_tile, M_pad) stores
            img = acc[:, b * m_pad:(b + 1) * m_pad] + bias_m
            o_ref[b] = img.astype(o_ref.dtype)

    # VMEM budget check (matters on v7x: 64 MiB physical / 32 MiB default scoped).
    item = jnp.dtype(out_dtype).itemsize
    citem = jnp.dtype(compute_dtype).itemsize
    est = (2 * (nb * c_in * h * w * item                 # x block (double-buffered)
                + co_tile * k * citem                    # weight tile
                + co_tile * w_out * 4                    # bias tile
                + nb * co_tile * m_pad * item)           # output block
           + k * nb * m_pad * citem)                     # persistent im2col scratch
    vmem_limit = 32 * 1024 * 1024
    assert est <= vmem_limit, (est, vmem_limit)

    out_flat = pl.pallas_call(
        kernel,
        out_shape=jax.ShapeDtypeStruct((n_pad, c_out, m_pad), out_dtype),
        grid=grid,
        in_specs=[
            # x block index is constant across the c axis -> stays resident.
            pl.BlockSpec((nb, c_in, h, w), lambda b, c: (b, 0, 0, 0)),
            pl.BlockSpec((co_tile, k), lambda b, c: (c, 0)),
            pl.BlockSpec((co_tile, w_out), lambda b, c: (c, 0)),
        ],
        out_specs=pl.BlockSpec((nb, co_tile, m_pad), lambda b, c: (b, c, 0)),
        scratch_shapes=[pltpu.VMEM((k, nb * m_pad), compute_dtype)],
        compiler_params=pltpu.CompilerParams(
            dimension_semantics=("parallel", "arbitrary"),
            vmem_limit_bytes=vmem_limit),
    )(x_nchw, w_mat, bias2d)

    # Wrapper: drop batch/lane padding, contiguous reshape back to NCHW.
    return out_flat[:n, :, :m].reshape(n, c_out, h_out, w_out)


def init_params(key, in_channels, out_channels, kernel_size, input_len):
    """Deterministic re-implementation of Conv2dUntiedBias.reset_parameters."""
    kh, kw = kernel_size
    w_out = input_len - kw + 1  # calc_output_width with stride=1
    n = in_channels * kh * kw
    stdv = 1.0 / math.sqrt(n)
    k_w, k_b = jax.random.split(key)
    weight = jax.random.uniform(
        k_w, (out_channels, in_channels, kh, kw),
        minval=-stdv, maxval=stdv, dtype=jnp.float32)
    bias = jax.random.uniform(
        k_b, (out_channels, 1, w_out),
        minval=-stdv, maxval=stdv, dtype=jnp.float32)
    return weight, bias


def _reference(x, weight, bias):
    ref = lax.conv_general_dilated(
        x, weight, window_strides=(1, 1), padding="VALID",
        dimension_numbers=("NCHW", "OIHW", "NCHW"),
        precision=lax.Precision.HIGHEST)
    return ref + bias[None]   # (1, C_out, 1, W_out) broadcasts over N and H_out


if __name__ == "__main__":
    key = jax.random.PRNGKey(0)
    k_x, k_p = jax.random.split(key)

    # Small shapes consistent with the module: NCHW input, square kernel.
    N, C_IN, H, W = 4, 4, 8, 16
    C_OUT, KSZ = 32, 3

    x = jax.random.normal(k_x, (N, C_IN, H, W), dtype=jnp.float32)
    weight, bias = init_params(k_p, C_IN, C_OUT, (KSZ, KSZ), input_len=W)
    ref = _reference(x, weight, bias)

    # 1) Default config: full-C_out tile, NB images per grid step, f32 MXU operands.
    out = jax.block_until_ready(conv2d_untied_bias(x, weight, bias))
    assert out.shape == ref.shape
    assert jnp.allclose(out, ref, atol=1e-4, rtol=1e-4), float(jnp.max(jnp.abs(out - ref)))

    # 2) C_out-tiled config: exercises the per-image patch caching across the
    #    "arbitrary" C_out-tile axis (grid = (2, 2)).
    out_t = jax.block_until_ready(conv2d_untied_bias(x, weight, bias, co_tile=16, nb=2))
    assert jnp.allclose(out_t, ref, atol=1e-4, rtol=1e-4), float(jnp.max(jnp.abs(out_t - ref)))

    # 3) bf16 MXU operands (v6e/v7x fast path), f32 accumulation.
    #    Compare against a reference computed on bf16-rounded operands so the
    #    check is tight and non-flaky (products are exact in f32, only the
    #    accumulation order differs).
    out_bf = jax.block_until_ready(
        conv2d_untied_bias(x, weight, bias, mxu_dtype=jnp.bfloat16))
    x_bf = x.astype(jnp.bfloat16).astype(jnp.float32)
    w_bf = weight.astype(jnp.bfloat16).astype(jnp.float32)
    ref_bf = _reference(x_bf, w_bf, bias)
    assert jnp.allclose(out_bf, ref_bf, atol=1e-3, rtol=1e-3), \
        float(jnp.max(jnp.abs(out_bf - ref_bf)))

    print("KERNEL_OK")
</pallas_src>

<mosaic_0001>
module attributes {stable_mosaic.version = 11 : i64} {
  func.func @kernel(%arg0: i32, %arg1: i32, %arg2: memref<2x4x8x16xf32, #tpu.memory_space<vmem>>, %arg3: memref<32x36xf32, #tpu.memory_space<vmem>>, %arg4: memref<32x14xf32, #tpu.memory_space<vmem>>, %arg5: memref<2x32x128xf32, #tpu.memory_space<vmem>>, %arg6: memref<36x256xf32, #tpu.memory_space<vmem>>) attributes {dimension_semantics = [#tpu.dimension_semantics<parallel>, #tpu.dimension_semantics<arbitrary>], iteration_bounds = array<i64: 2, 1>, scalar_prefetch = 0 : i64, scratch_operands = 1 : i64, tpu.core_type = #tpu.core_type<tc>, window_params = [{transform_indices = @transform_0, window_bounds = array<i64: 2, 4, 8, 16>}, {transform_indices = @transform_1, window_bounds = array<i64: 32, 36>}, {transform_indices = @transform_2, window_bounds = array<i64: 32, 14>}, {transform_indices = @transform_3, window_bounds = array<i64: 2, 32, 128>}]} {
    %c0_i32 = arith.constant 0 : i32
    %0 = arith.cmpi eq, %arg1, %c0_i32 : i32
    %1 = arith.extui %0 : i1 to i32
    %c0_i32_0 = arith.constant 0 : i32
    %2 = arith.cmpi ne, %1, %c0_i32_0 : i32
    scf.if %2 {
      %cst_12 = arith.constant 0.000000e+00 : f32
      %19 = vector.broadcast %cst_12 : f32 to vector<36x256xf32>
      %c0_13 = arith.constant 0 : index
      %c0_14 = arith.constant 0 : index
      %20 = vector.load %arg6[%c0_13, %c0_14] : memref<36x256xf32, #tpu.memory_space<vmem>>, vector<36x256xf32>
      tpu.vector_store %arg6[%c0_13, %c0_14], %19 {strides = array<i32>} : memref<36x256xf32, #tpu.memory_space<vmem>>, vector<36x256xf32>,
      %c0_15 = arith.constant 0 : index
      %c0_16 = arith.constant 0 : index
      %c0_17 = arith.constant 0 : index
      %c0_18 = arith.constant 0 : index
      %21 = vector.load %arg2[%c0_15, %c0_16, %c0_17, %c0_18] : memref<2x4x8x16xf32, #tpu.memory_space<vmem>>, vector<1x4x8x16xf32>
      %22 = vector.shape_cast %21 : vector<1x4x8x16xf32> to vector<4x8x16xf32>
      %23 = vector.extract_strided_slice %22 {offsets = [0, 0, 0], sizes = [4, 6, 14], strides = [1, 1, 1]} : vector<4x8x16xf32> to vector<4x6x14xf32>
      %24 = vector.shape_cast %23 : vector<4x6x14xf32> to vector<4x84xf32>
      %c0_19 = arith.constant 0 : index
      %c0_20 = arith.constant 0 : index
      %25 = vector.load %arg6[%c0_19, %c0_20] : memref<36x256xf32, #tpu.memory_space<vmem>>, vector<4x84xf32>
      tpu.vector_store %arg6[%c0_19, %c0_20], %24 {strides = array<i32>} : memref<36x256xf32, #tpu.memory_space<vmem>>, vector<4x84xf32>,
      %26 = vector.extract_strided_slice %22 {offsets = [0, 0, 1], sizes = [4, 6, 14], strides = [1, 1, 1]} : vector<4x8x16xf32> to vector<4x6x14xf32>
      %27 = vector.shape_cast %26 : vector<4x6x14xf32> to vector<4x84xf32>
      %c4 = arith.constant 4 : index
      %c0_21 = arith.constant 0 : index
      %28 = vector.load %arg6[%c4, %c0_21] : memref<36x256xf32, #tpu.memory_space<vmem>>, vector<4x84xf32>
      tpu.vector_store %arg6[%c4, %c0_21], %27 {strides = array<i32>} : memref<36x256xf32, #tpu.memory_space<vmem>>, vector<4x84xf32>,
      %29 = vector.extract_strided_slice %22 {offsets = [0, 0, 2], sizes = [4, 6, 14], strides = [1, 1, 1]} : vector<4x8x16xf32> to vector<4x6x14xf32>
      %30 = vector.shape_cast %29 : vector<4x6x14xf32> to vector<4x84xf32>
      %c8 = arith.constant 8 : index
      %c0_22 = arith.constant 0 : index
      %31 = vector.load %arg6[%c8, %c0_22] : memref<36x256xf32, #tpu.memory_space<vmem>>, vector<4x84xf32>
      tpu.vector_store %arg6[%c8, %c0_22], %30 {strides = array<i32>} : memref<36x256xf32, #tpu.memory_space<vmem>>, vector<4x84xf32>,
      %32 = vector.extract_strided_slice %22 {offsets = [0, 1, 0], sizes = [4, 6, 14], strides = [1, 1, 1]} : vector<4x8x16xf32> to vector<4x6x14xf32>
      %33 = vector.shape_cast %32 : vector<4x6x14xf32> to vector<4x84xf32>
      %c12 = arith.constant 12 : index
      %c0_23 = arith.constant 0 : index
      %34 = vector.load %arg6[%c12, %c0_23] : memref<36x256xf32, #tpu.memory_space<vmem>>, vector<4x84xf32>
      tpu.vector_store %arg6[%c12, %c0_23], %33 {strides = array<i32>} : memref<36x256xf32, #tpu.memory_space<vmem>>, vector<4x84xf32>,
      %35 = vector.extract_strided_slice %22 {offsets = [0, 1, 1], sizes = [4, 6, 14], strides = [1, 1, 1]} : vector<4x8x16xf32> to vector<4x6x14xf32>
      %36 = vector.shape_cast %35 : vector<4x6x14xf32> to vector<4x84xf32>
      %c16 = arith.constant 16 : index
      %c0_24 = arith.constant 0 : index
      %37 = vector.load %arg6[%c16, %c0_24] : memref<36x256xf32, #tpu.memory_space<vmem>>, vector<4x84xf32>
      tpu.vector_store %arg6[%c16, %c0_24], %36 {strides = array<i32>} : memref<36x256xf32, #tpu.memory_space<vmem>>, vector<4x84xf32>,
      %38 = vector.extract_strided_slice %22 {offsets = [0, 1, 2], sizes = [4, 6, 14], strides = [1, 1, 1]} : vector<4x8x16xf32> to vector<4x6x14xf32>
      %39 = vector.shape_cast %38 : vector<4x6x14xf32> to vector<4x84xf32>
      %c20 = arith.constant 20 : index
      %c0_25 = arith.constant 0 : index
      %40 = vector.load %arg6[%c20, %c0_25] : memref<36x256xf32, #tpu.memory_space<vmem>>, vector<4x84xf32>
      tpu.vector_store %arg6[%c20, %c0_25], %39 {strides = array<i32>} : memref<36x256xf32, #tpu.memory_space<vmem>>, vector<4x84xf32>,
      %41 = vector.extract_strided_slice %22 {offsets = [0, 2, 0], sizes = [4, 6, 14], strides = [1, 1, 1]} : vector<4x8x16xf32> to vector<4x6x14xf32>
      %42 = vector.shape_cast %41 : vector<4x6x14xf32> to vector<4x84xf32>
      %c24 = arith.constant 24 : index
      %c0_26 = arith.constant 0 : index
      %43 = vector.load %arg6[%c24, %c0_26] : memref<36x256xf32, #tpu.memory_space<vmem>>, vector<4x84xf32>
      tpu.vector_store %arg6[%c24, %c0_26], %42 {strides = array<i32>} : memref<36x256xf32, #tpu.memory_space<vmem>>, vector<4x84xf32>,
      %44 = vector.extract_strided_slice %22 {offsets = [0, 2, 1], sizes = [4, 6, 14], strides = [1, 1, 1]} : vector<4x8x16xf32> to vector<4x6x14xf32>
      %45 = vector.shape_cast %44 : vector<4x6x14xf32> to vector<4x84xf32>
      %c28 = arith.constant 28 : index
      %c0_27 = arith.constant 0 : index
      %46 = vector.load %arg6[%c28, %c0_27] : memref<36x256xf32, #tpu.memory_space<vmem>>, vector<4x84xf32>
      tpu.vector_store %arg6[%c28, %c0_27], %45 {strides = array<i32>} : memref<36x256xf32, #tpu.memory_space<vmem>>, vector<4x84xf32>,
      %47 = vector.extract_strided_slice %22 {offsets = [0, 2, 2], sizes = [4, 6, 14], strides = [1, 1, 1]} : vector<4x8x16xf32> to vector<4x6x14xf32>
      %48 = vector.shape_cast %47 : vector<4x6x14xf32> to vector<4x84xf32>
      %c32 = arith.constant 32 : index
      %c0_28 = arith.constant 0 : index
      %49 = vector.load %arg6[%c32, %c0_28] : memref<36x256xf32, #tpu.memory_space<vmem>>, vector<4x84xf32>
      tpu.vector_store %arg6[%c32, %c0_28], %48 {strides = array<i32>} : memref<36x256xf32, #tpu.memory_space<vmem>>, vector<4x84xf32>,
      %c1_29 = arith.constant 1 : index
      %c0_30 = arith.constant 0 : index
      %c0_31 = arith.constant 0 : index
      %c0_32 = arith.constant 0 : index
      %50 = vector.load %arg2[%c1_29, %c0_30, %c0_31, %c0_32] : memref<2x4x8x16xf32, #tpu.memory_space<vmem>>, vector<1x4x8x16xf32>
      %51 = vector.shape_cast %50 : vector<1x4x8x16xf32> to vector<4x8x16xf32>
      %52 = vector.extract_strided_slice %51 {offsets = [0, 0, 0], sizes = [4, 6, 14], strides = [1, 1, 1]} : vector<4x8x16xf32> to vector<4x6x14xf32>
      %53 = vector.shape_cast %52 : vector<4x6x14xf32> to vector<4x84xf32>
      %c0_33 = arith.constant 0 : index
      %c128 = arith.constant 128 : index
      %54 = vector.load %arg6[%c0_33, %c128] : memref<36x256xf32, #tpu.memory_space<vmem>>, vector<4x84xf32>
      tpu.vector_store %arg6[%c0_33, %c128], %53 {strides = array<i32>} : memref<36x256xf32, #tpu.memory_space<vmem>>, vector<4x84xf32>,
      %55 = vector.extract_strided_slice %51 {offsets = [0, 0, 1], sizes = [4, 6, 14], strides = [1, 1, 1]} : vector<4x8x16xf32> to vector<4x6x14xf32>
      %56 = vector.shape_cast %55 : vector<4x6x14xf32> to vector<4x84xf32>
      %c4_34 = arith.constant 4 : index
      %c128_35 = arith.constant 128 : index
      %57 = vector.load %arg6[%c4_34, %c128_35] : memref<36x256xf32, #tpu.memory_space<vmem>>, vector<4x84xf32>
      tpu.vector_store %arg6[%c4_34, %c128_35], %56 {strides = array<i32>} : memref<36x256xf32, #tpu.memory_space<vmem>>, vector<4x84xf32>,
      %58 = vector.extract_strided_slice %51 {offsets = [0, 0, 2], sizes = [4, 6, 14], strides = [1, 1, 1]} : vector<4x8x16xf32> to vector<4x6x14xf32>
      %59 = vector.shape_cast %58 : vector<4x6x14xf32> to vector<4x84xf32>
      %c8_36 = arith.constant 8 : index
      %c128_37 = arith.constant 128 : index
      %60 = vector.load %arg6[%c8_36, %c128_37] : memref<36x256xf32, #tpu.memory_space<vmem>>, vector<4x84xf32>
      tpu.vector_store %arg6[%c8_36, %c128_37], %59 {strides = array<i32>} : memref<36x256xf32, #tpu.memory_space<vmem>>, vector<4x84xf32>,
      %61 = vector.extract_strided_slice %51 {offsets = [0, 1, 0], sizes = [4, 6, 14], strides = [1, 1, 1]} : vector<4x8x16xf32> to vector<4x6x14xf32>
      %62 = vector.shape_cast %61 : vector<4x6x14xf32> to vector<4x84xf32>
      %c12_38 = arith.constant 12 : index
      %c128_39 = arith.constant 128 : index
      %63 = vector.load %arg6[%c12_38, %c128_39] : memref<36x256xf32, #tpu.memory_space<vmem>>, vector<4x84xf32>
      tpu.vector_store %arg6[%c12_38, %c128_39], %62 {strides = array<i32>} : memref<36x256xf32, #tpu.memory_space<vmem>>, vector<4x84xf32>,
      %64 = vector.extract_strided_slice %51 {offsets = [0, 1, 1], sizes = [4, 6, 14], strides = [1, 1, 1]} : vector<4x8x16xf32> to vector<4x6x14xf32>
      %65 = vector.shape_cast %64 : vector<4x6x14xf32> to vector<4x84xf32>
      %c16_40 = arith.constant 16 : index
      %c128_41 = arith.constant 128 : index
      %66 = vector.load %arg6[%c16_40, %c128_41] : memref<36x256xf32, #tpu.memory_space<vmem>>, vector<4x84xf32>
      tpu.vector_store %arg6[%c16_40, %c128_41], %65 {strides = array<i32>} : memref<36x256xf32, #tpu.memory_space<vmem>>, vector<4x84xf32>,
      %67 = vector.extract_strided_slice %51 {offsets = [0, 1, 2], sizes = [4, 6, 14], strides = [1, 1, 1]} : vector<4x8x16xf32> to vector<4x6x14xf32>
      %68 = vector.shape_cast %67 : vector<4x6x14xf32> to vector<4x84xf32>
      %c20_42 = arith.constant 20 : index
      %c128_43 = arith.constant 128 : index
      %69 = vector.load %arg6[%c20_42, %c128_43] : memref<36x256xf32, #tpu.memory_space<vmem>>, vector<4x84xf32>
      tpu.vector_store %arg6[%c20_42, %c128_43], %68 {strides = array<i32>} : memref<36x256xf32, #tpu.memory_space<vmem>>, vector<4x84xf32>,
      %70 = vector.extract_strided_slice %51 {offsets = [0, 2, 0], sizes = [4, 6, 14], strides = [1, 1, 1]} : vector<4x8x16xf32> to vector<4x6x14xf32>
      %71 = vector.shape_cast %70 : vector<4x6x14xf32> to vector<4x84xf32>
      %c24_44 = arith.constant 24 : index
      %c128_45 = arith.constant 128 : index
      %72 = vector.load %arg6[%c24_44, %c128_45] : memref<36x256xf32, #tpu.memory_space<vmem>>, vector<4x84xf32>
      tpu.vector_store %arg6[%c24_44, %c128_45], %71 {strides = array<i32>} : memref<36x256xf32, #tpu.memory_space<vmem>>, vector<4x84xf32>,
      %73 = vector.extract_strided_slice %51 {offsets = [0, 2, 1], sizes = [4, 6, 14], strides = [1, 1, 1]} : vector<4x8x16xf32> to vector<4x6x14xf32>
      %74 = vector.shape_cast %73 : vector<4x6x14xf32> to vector<4x84xf32>
      %c28_46 = arith.constant 28 : index
      %c128_47 = arith.constant 128 : index
      %75 = vector.load %arg6[%c28_46, %c128_47] : memref<36x256xf32, #tpu.memory_space<vmem>>, vector<4x84xf32>
      tpu.vector_store %arg6[%c28_46, %c128_47], %74 {strides = array<i32>} : memref<36x256xf32, #tpu.memory_space<vmem>>, vector<4x84xf32>,
      %76 = vector.extract_strided_slice %51 {offsets = [0, 2, 2], sizes = [4, 6, 14], strides = [1, 1, 1]} : vector<4x8x16xf32> to vector<4x6x14xf32>
      %77 = vector.shape_cast %76 : vector<4x6x14xf32> to vector<4x84xf32>
      %c32_48 = arith.constant 32 : index
      %c128_49 = arith.constant 128 : index
      %78 = vector.load %arg6[%c32_48, %c128_49] : memref<36x256xf32, #tpu.memory_space<vmem>>, vector<4x84xf32>
      tpu.vector_store %arg6[%c32_48, %c128_49], %77 {strides = array<i32>} : memref<36x256xf32, #tpu.memory_space<vmem>>, vector<4x84xf32>,
    } else {
    }
    %c0 = arith.constant 0 : index
    %c0_1 = arith.constant 0 : index
    %3 = vector.load %arg3[%c0, %c0_1] : memref<32x36xf32, #tpu.memory_space<vmem>>, vector<32x36xf32>
    %c0_2 = arith.constant 0 : index
    %c0_3 = arith.constant 0 : index
    %4 = vector.load %arg6[%c0_2, %c0_3] : memref<36x256xf32, #tpu.memory_space<vmem>>, vector<36x256xf32>
    %cst = arith.constant dense<0.000000e+00> : vector<32x256xf32>
    %5 = tpu.matmul %3, %4, %cst {dimension_numbers = #tpu.dot_dimension_numbers<[1], [0], [0], [1], [0, 0, 1, 1], [], []>} : vector<32x36xf32>, vector<36x256xf32>, vector<32x256xf32> -> vector<32x256xf32>
    %c0_4 = arith.constant 0 : index
    %c0_5 = arith.constant 0 : index
    %6 = vector.load %arg4[%c0_4, %c0_5] : memref<32x14xf32, #tpu.memory_space<vmem>>, vector<32x14xf32>
    %cst_6 = arith.constant 0.000000e+00 : f32
    %7 = vector.broadcast %cst_6 : f32 to vector<32x44xf32>
    %8 = tpu.concatenate %6, %6, %6, %6, %6, %6, %7 in 1 : vector<32x14xf32>, vector<32x14xf32>, vector<32x14xf32>, vector<32x14xf32>, vector<32x14xf32>, vector<32x14xf32>, vector<32x44xf32> -> vector<32x128xf32>
    %9 = vector.extract_strided_slice %5 {offsets = [0, 0], sizes = [32, 128], strides = [1, 1]} : vector<32x256xf32> to vector<32x128xf32>
    %10 = arith.addf %9, %8 : vector<32x128xf32>
    %c0_7 = arith.constant 0 : index
    %c0_8 = arith.constant 0 : index
    %c0_9 = arith.constant 0 : index
    %11 = vector.load %arg5[%c0_7, %c0_8, %c0_9] : memref<2x32x128xf32, #tpu.memory_space<vmem>>, vector<1x32x128xf32>
    %12 = vector.shape_cast %11 : vector<1x32x128xf32> to vector<32x128xf32>
    %13 = vector.shape_cast %10 : vector<32x128xf32> to vector<1x32x128xf32>
    tpu.vector_store %arg5[%c0_7, %c0_8, %c0_9], %13 {strides = array<i32>} : memref<2x32x128xf32, #tpu.memory_space<vmem>>, vector<1x32x128xf32>,
    %14 = vector.extract_strided_slice %5 {offsets = [0, 128], sizes = [32, 128], strides = [1, 1]} : vector<32x256xf32> to vector<32x128xf32>
    %15 = arith.addf %14, %8 : vector<32x128xf32>
    %c1 = arith.constant 1 : index
    %c0_10 = arith.constant 0 : index
    %c0_11 = arith.constant 0 : index
    %16 = vector.load %arg5[%c1, %c0_10, %c0_11] : memref<2x32x128xf32, #tpu.memory_space<vmem>>, vector<1x32x128xf32>
    %17 = vector.shape_cast %16 : vector<1x32x128xf32> to vector<32x128xf32>
    %18 = vector.shape_cast %15 : vector<32x128xf32> to vector<1x32x128xf32>
    tpu.vector_store %arg5[%c1, %c0_10, %c0_11], %18 {strides = array<i32>} : memref<2x32x128xf32, #tpu.memory_space<vmem>>, vector<1x32x128xf32>,
    return
  }
  func.func @transform_0(%arg0: i32, %arg1: i32) -> (i32, i32, i32, i32) {
    %c0_i32 = arith.constant 0 : i32
    %c0_i32_0 = arith.constant 0 : i32
    %c0_i32_1 = arith.constant 0 : i32
    %c0_i32_2 = arith.constant 0 : i32
    return %arg0, %c0_i32, %c0_i32_0, %c0_i32_1 : i32, i32, i32, i32
  }
  func.func @transform_1(%arg0: i32, %arg1: i32) -> (i32, i32) {
    %c0_i32 = arith.constant 0 : i32
    %c0_i32_0 = arith.constant 0 : i32
    return %arg1, %c0_i32 : i32, i32
  }
  func.func @transform_2(%arg0: i32, %arg1: i32) -> (i32, i32) {
    %c0_i32 = arith.constant 0 : i32
    %c0_i32_0 = arith.constant 0 : i32
    return %arg1, %c0_i32 : i32, i32
  }
  func.func @transform_3(%arg0: i32, %arg1: i32) -> (i32, i32, i32) {
    %c0_i32 = arith.constant 0 : i32
    %c0_i32_0 = arith.constant 0 : i32
    return %arg0, %arg1, %c0_i32 : i32, i32, i32
  }
}

</mosaic_0001>

<llo_original>
// kernel: tpu_custom_call.1
$region0: #{tpu_custom_call.1}
  #allocation0 [shape = 'u32[]', space=smem, size = 0x4, offset = 0x4, fixed_abs, tag = 'smem constant byte address 0x4 - core index']
  #allocation1 [shape = 'u32[144,128]{1,0:T(1,128)}', space=vmem, size = 0x12000, scoped, tag = 'internal scratch']
  #allocation2 [shape = 'f32[36,256]{1,0:T(8,128)}', space=vmem, size = 0xa000, scoped, tag = 'scratch operand']
  %s0 = inlined_call_operand.hbm [shape: f32[4,4,8,16], index: 0, kind: input, shape index: {}]
  %s1 = inlined_call_operand.vmem [shape: f32[32,36], index: 1, kind: input, shape index: {}]
  %s2 = inlined_call_operand.vmem [shape: f32[32,14], index: 2, kind: input, shape index: {}]
  %s3 = inlined_call_operand.hbm [shape: f32[4,32,128], index: 3, kind: output, shape index: {}]
  %s4 = sld [smem:[#allocation0]]
  $region53: #{tpu_custom_call.1} parent=0
    _
  %s6 = ssub.s32 1, %s4
  %s7 = scalar_select 0, %s6, %s4
  $region1: #{tpu_custom_call.1} parent=0
    #allocation3 [shape = 'u8[65536]{0}', space=vmem, size = 0x10000, scoped, tag = 'input window, operand 0']
    #allocation4 [shape = 's32[2]{0}', space=sflag, size = 0x8, scoped, tag = 'scoped memory for tpu_custom_call.1']
    #allocation5 [shape = 's32[2]{0}', space=sflag, size = 0x8, scoped, tag = 'scoped memory for tpu_custom_call.1']
    #allocation6 [shape = 'u8[65536]{0}', space=vmem, size = 0x10000, scoped, tag = 'output window, operand 0']
    %8 = vsyncpa [#allocation4], 0
    %s9 = scalar_lea.sflag [#allocation4], 1
    %10 = vsyncpa %s9, 0
    %11 = vsyncpa [#allocation5], 0
    %s12 = scalar_lea.sflag [#allocation5], 1
    %13 = vsyncpa %s12, 0
    loop: start=0, step=1, limit=4
    $region2: #{tpu_custom_call.1} parent=1 // loop_pre_header
      _
    $region3: #{tpu_custom_call.1} parent=1 // loop_header
      %s15 = sphi 0, %s19
      %p16 = scmp.ge.s32.totalorder %s15, 4
      %s22 = sphi 0, %s34
      %s23 = sphi 0, %s30
      %s24 = sphi 0, %s22
      %s25 = sphi 0, %s23
      %s26 = sphi 0, %s24
      %s27 = sphi 0, %s25
      %s37 = sphi 0, %s39
      %s40 = sphi 0, %s37
      %s41 = sphi 0, %s40
      %s57 = sphi 0, %s41
      %s63 = sphi 0, %s65
      %s66 = sphi 0, %s63
      %s67 = sphi 0, %s66
      %s83 = sphi 0, %s67
      %s89 = sphi 0, %s91
      %s92 = sphi 0, %s89
      %s93 = sphi 0, %s92
      %s109 = sphi 0, %s93
      %s117 = sphi 0, %s119
      %s120 = sphi 0, %s117
      %s121 = sphi 0, %s120
      %s137 = sphi 0, %s121
    $region4: #{tpu_custom_call.1} parent=1 // loop_header_branch
      %18 = sbr.rel (%p16) target = $region8
    $region5: #{tpu_custom_call.1} parent=1 // loop_body
      %s20 = ssub.s32 %s15, 1
      %s21 = ssub.s32 %s15, 2
      %s28 = sadd.s32 1, %s23
      %p29 = scmp.ge.s32.totalorder %s28, 1
      %s30 = scalar_select %p29, 0, %s28
      %s31 = sadd.s32 1, %s22
      %s32 = scalar_select %p29, %s31, %s22
      %p33 = scmp.ge.s32.totalorder %s32, 2
      %s34 = scalar_select %p33, 0, %s32
      %s35 = ssub.s32 %s22, %s34
      %p36 = scmp.eq.s32.totalorder %s35, 0
      %s38 = sadd.s32 %s37, 1
      %s39 = scalar_select %p36, %s37, %s38
      %p42 = pneg %p36
      %p43 = scmp.eq.s32.totalorder %s15, 1
      %p44 = por %p42, %p43
      %p45 = scmp.ne.s32.totalorder %s37, %s40
      %p46 = scmp.eq.s32.totalorder %s15, 0
      %p47 = por %p45, %p46
      %p48 = scmp.ne.s32.totalorder %s37, %s40
      %p49 = scmp.eq.s32.totalorder %s20, 1
      %p50 = por %p48, %p49
      %p51 = scmp.ne.s32.totalorder %s40, %s41
      %p52 = scmp.eq.s32.totalorder %s20, 0
      %p53 = por %p51, %p52
      %p54 = scmp.ne.s32.totalorder %s40, %s41
      %p55 = scmp.eq.s32.totalorder %s21, 1
      %p56 = por %p54, %p55
      %p58 = scmp.ne.s32.totalorder %s41, %s57
      %p59 = scmp.eq.s32.totalorder %s21, 0
      %p60 = por %p58, %p59
      %s61 = ssub.s32 %s23, %s30
      %p62 = scmp.eq.s32.totalorder %s61, 0
      %s64 = sadd.s32 %s63, 1
      %s65 = scalar_select %p62, %s63, %s64
      %p68 = pneg %p62
      %p69 = scmp.eq.s32.totalorder %s15, 1
      %p70 = por %p68, %p69
      %p71 = scmp.ne.s32.totalorder %s63, %s66
      %p72 = scmp.eq.s32.totalorder %s15, 0
      %p73 = por %p71, %p72
      %p74 = scmp.ne.s32.totalorder %s63, %s66
      %p75 = scmp.eq.s32.totalorder %s20, 1
      %p76 = por %p74, %p75
      %p77 = scmp.ne.s32.totalorder %s66, %s67
      %p78 = scmp.eq.s32.totalorder %s20, 0
      %p79 = por %p77, %p78
      %p80 = scmp.ne.s32.totalorder %s66, %s67
      %p81 = scmp.eq.s32.totalorder %s21, 1
      %p82 = por %p80, %p81
      %p84 = scmp.ne.s32.totalorder %s67, %s83
      %p85 = scmp.eq.s32.totalorder %s21, 0
      %p86 = por %p84, %p85
      %s87 = ssub.s32 %s23, %s30
      %p88 = scmp.eq.s32.totalorder %s87, 0
      %s90 = sadd.s32 %s89, 1
      %s91 = scalar_select %p88, %s89, %s90
      %p94 = pneg %p88
      %p95 = scmp.eq.s32.totalorder %s15, 1
      %p96 = por %p94, %p95
      %p97 = scmp.ne.s32.totalorder %s89, %s92
      %p98 = scmp.eq.s32.totalorder %s15, 0
      %p99 = por %p97, %p98
      %p100 = scmp.ne.s32.totalorder %s89, %s92
      %p101 = scmp.eq.s32.totalorder %s20, 1
      %p102 = por %p100, %p101
      %p103 = scmp.ne.s32.totalorder %s92, %s93
      %p104 = scmp.eq.s32.totalorder %s20, 0
      %p105 = por %p103, %p104
      %p106 = scmp.ne.s32.totalorder %s92, %s93
      %p107 = scmp.eq.s32.totalorder %s21, 1
      %p108 = por %p106, %p107
      %p110 = scmp.ne.s32.totalorder %s93, %s109
      %p111 = scmp.eq.s32.totalorder %s21, 0
      %p112 = por %p110, %p111
      %s113 = ssub.s32 %s22, %s34
      %s114 = ssub.s32 %s23, %s30
      %s115 = sor.u32 %s113, %s114
      %p116 = scmp.eq.s32.totalorder %s115, 0
      %s118 = sadd.s32 %s117, 1
      %s119 = scalar_select %p116, %s117, %s118
      %p122 = pneg %p116
      %p123 = scmp.eq.s32.totalorder %s15, 1
      %p124 = por %p122, %p123
      %p125 = scmp.ne.s32.totalorder %s117, %s120
      %p126 = scmp.eq.s32.totalorder %s15, 0
      %p127 = por %p125, %p126
      %p128 = scmp.ne.s32.totalorder %s117, %s120
      %p129 = scmp.eq.s32.totalorder %s20, 1
      %p130 = por %p128, %p129
      %p131 = scmp.ne.s32.totalorder %s120, %s121
      %p132 = scmp.eq.s32.totalorder %s20, 0
      %p133 = por %p131, %p132
      %p134 = scmp.ne.s32.totalorder %s120, %s121
      %p135 = scmp.eq.s32.totalorder %s21, 1
      %p136 = por %p134, %p135
      %p138 = scmp.ne.s32.totalorder %s121, %s137
      %p139 = scmp.eq.s32.totalorder %s21, 0
      %p140 = por %p138, %p139
      %p141 = scmp.le.s32.totalorder 1, %s15
      %p142 = scmp.lt.s32.totalorder %s15, 3
      %p143 = pnand %p141, %p142
      %p144 = pneg %p143
      // Predicated region
      $region9: #{tpu_custom_call.1} parent=5 // pred_check
        _
      $region10: #{tpu_custom_call.1} parent=5 // pred_check_branch
        %146 = sbr.rel (%p143) target = $region12
      $region11: #{tpu_custom_call.1} parent=5 // pred_region
        %s147 = ssub.s32 %s15, 1
        // Predicated region
        $region13: #{tpu_custom_call.1} parent=11 // pred_check
          %p148 = pneg %p79
        $region14: #{tpu_custom_call.1} parent=11 // pred_check_branch
          %150 = sbr.rel (%p148) target = $region16
        $region15: #{tpu_custom_call.1} parent=11 // pred_region
          %s151 = smul.u32 4, %s25
          %p152 = scmp.lt.s32.totalorder %s151, 3
          %s153 = scalar_select %p152, %s151, 3
          %s154 = smul.addr %s153, 8
          %s155 = scalar_lea.vmem %s1, %s154
          %s156 = smul.u32 4, %s25
        $region16: #{tpu_custom_call.1} parent=11 // pred_fallthru
          _
        // Predicated region
        $region17: #{tpu_custom_call.1} parent=11 // pred_check
          %p157 = pneg %p105
        $region18: #{tpu_custom_call.1} parent=11 // pred_check_branch
          %159 = sbr.rel (%p157) target = $region20
        $region19: #{tpu_custom_call.1} parent=11 // pred_region
          %s160 = smul.u32 4, %s25
          %p161 = scmp.lt.s32.totalorder %s160, 3
          %s162 = scalar_select %p161, %s160, 3
          %s163 = smul.addr %s162, 8
          %s164 = scalar_lea.vmem %s2, %s163
          %s165 = smul.u32 4, %s25
        $region20: #{tpu_custom_call.1} parent=11 // pred_fallthru
          _
      $region12: #{tpu_custom_call.1} parent=5 // pred_fallthru
        _
      %p166 = scmp.lt.s32.totalorder %s15, 2
      // Predicated region
      $region21: #{tpu_custom_call.1} parent=5 // pred_check
        %p167 = pneg %p166
      $region22: #{tpu_custom_call.1} parent=5 // pred_check_branch
        %169 = sbr.rel (%p167) target = $region24
      $region23: #{tpu_custom_call.1} parent=5 // pred_region
        // Predicated region
        $region25: #{tpu_custom_call.1} parent=23 // pred_check
          %p170 = pneg %p47
        $region26: #{tpu_custom_call.1} parent=23 // pred_check_branch
          %172 = sbr.rel (%p170) target = $region28
        $region27: #{tpu_custom_call.1} parent=23 // pred_region
          %s173 = sand.u32 %s37, 1
          %s174 = scalar_lea.sflag [#allocation4], %s173
          %s175 = sand.u32 %s37, 1
          %s176 = smul.addr %s175, 64
          %s177 = scalar_lea.vmem [#allocation3], %s176
          %s178 = smul.u32 2, %s22
          %s180 = ssub.s32 1024, 1024
          %181 = vsyncadd %s174, %s180
          %s182 = smul.addr %s178, 4
          %s183 = smul.addr %s182, 128
          %s184 = scalar_lea.hbm %s0, %s183
          %s185 = sshll.u32 %s177, 4
          %s186 = int_to_ptr.vmem [resolvable:$true] %s185
          %191 = dma.hbm_to_vmem [thread:$0]  %s184, 1024, %s186, %s174, 128, 128, 8
        $region28: #{tpu_custom_call.1} parent=23 // pred_fallthru
          _
      $region24: #{tpu_custom_call.1} parent=5 // pred_fallthru
        _
      %p192 = scmp.le.s32.totalorder 1, %s15
      %p193 = scmp.lt.s32.totalorder %s15, 3
      %p194 = pnand %p192, %p193
      %p195 = pneg %p194
      // Predicated region
      $region29: #{tpu_custom_call.1} parent=5 // pred_check
        _
      $region30: #{tpu_custom_call.1} parent=5 // pred_check_branch
        %197 = sbr.rel (%p194) target = $region32
      $region31: #{tpu_custom_call.1} parent=5 // pred_region
        %s198 = ssub.s32 %s15, 1
        %s199 = sand.u32 %s40, 1
        %s200 = scalar_lea.sflag [#allocation4], %s199
        %s201 = sand.u32 %s40, 1
        %s202 = smul.addr %s201, 64
        %s203 = scalar_lea.vmem [#allocation3], %s202
        // Predicated region
        $region33: #{tpu_custom_call.1} parent=31 // pred_check
          %p204 = pneg %p53
        $region34: #{tpu_custom_call.1} parent=31 // pred_check_branch
          %206 = sbr.rel (%p204) target = $region36
        $region35: #{tpu_custom_call.1} parent=31 // pred_region
          %207 = dma.done %s200, 1024
        $region36: #{tpu_custom_call.1} parent=31 // pred_fallthru
          _
        %s208 = sand.u32 %s40, 1
        %s209 = scalar_lea.sflag [#allocation4], %s208
        %s210 = sand.u32 %s40, 1
        %s211 = smul.addr %s210, 64
        %s212 = scalar_lea.vmem [#allocation3], %s211
        %p213 = pneg %p53
        %p214 = pneg %p50
        %s215 = smul.u32 4, %s25
        %p216 = scmp.lt.s32.totalorder %s215, 3
        %s217 = scalar_select %p216, %s215, 3
        %s218 = smul.addr %s217, 8
        %s219 = scalar_lea.vmem %s1, %s218
        %p220 = pneg %p79
        %p221 = pneg %p76
        %s222 = smul.u32 4, %s25
        %p223 = scmp.lt.s32.totalorder %s222, 3
        %s224 = scalar_select %p223, %s222, 3
        %s225 = smul.addr %s224, 8
        %s226 = scalar_lea.vmem %s2, %s225
        %p227 = pneg %p105
        %p228 = pneg %p102
        %p229 = pneg %p133
        %p230 = pneg %p130
        %s231 = sand.u32 %s120, 1
        %s232 = scalar_lea.sflag [#allocation5], %s231
        %s233 = sand.u32 %s120, 1
        %s234 = smul.addr %s233, 64
        %s235 = scalar_lea.vmem [#allocation6], %s234
        %s236 = smul.u32 2, %s24
        %s237 = smul.u32 4, %s25
        %p238 = scmp.lt.s32.totalorder %s237, 3
        %s239 = scalar_select %p238, %s237, 3
        %s240 = smul.addr %s239, 8
        %s241 = scalar_lea.vmem %s1, %s240
        %s242 = smul.u32 4, %s25
        %s243 = smul.u32 4, %s25
        %p244 = scmp.lt.s32.totalorder %s243, 3
        %s245 = scalar_select %p244, %s243, 3
        %s246 = smul.addr %s245, 8
        %s247 = scalar_lea.vmem %s2, %s246
        %s248 = smul.u32 4, %s25
        %s249 = smul.u32 2, %s24
        %s250 = smul.u32 4, %s25
        %p251 = scmp.eq.s32.totalorder %s25, 0
        // Predicated region
        $region37: #{tpu_custom_call.1} parent=31 // pred_check
          %p252 = pneg %p251
        $region38: #{tpu_custom_call.1} parent=31 // pred_check_branch
          %254 = sbr.rel (%p252) target = $region40
        $region39: #{tpu_custom_call.1} parent=31 // pred_region
          %255 = vst [vmem:[#allocation2] sm:$0xff] 0.0
          %256 = vst [vmem:[#allocation2 + $0x8] sm:$0xff] 0.0
          %257 = vst [vmem:[#allocation2 + $0x10] sm:$0xff] 0.0
          %258 = vst [vmem:[#allocation2 + $0x18] sm:$0xff] 0.0
          %259 = vst [vmem:[#allocation2 + $0x20] sm:$0xff] 0.0
          %260 = vst [vmem:[#allocation2 + $0x28] sm:$0xff] 0.0
          %261 = vst [vmem:[#allocation2 + $0x30] sm:$0xff] 0.0
          %262 = vst [vmem:[#allocation2 + $0x38] sm:$0xff] 0.0
          %263 = vst [vmem:[#allocation2 + $0x40] sm:$0xf] 0.0
          %264 = vst [vmem:[#allocation2 + $0x48] sm:$0xf] 0.0
          %v265 = vld [vmem:[%s203] sm:$0xff]
          %v266 = vld [vmem:[%s203 + $0x8] sm:$0xff]
          %v267 = vld [vmem:[%s203 + $0x10] sm:$0xff]
          %v268 = vld [vmem:[%s203 + $0x18] sm:$0xff]
          %v269 = vcombine.low %v265, %v267
          %v270 = vcombine.high %v265, %v267
          %v272 = vunpack.c.l.s4 1983009808
          %v273 = vunpack.c.0.s8 %v272
          %v274 = vlaneseq
          %v275 = vshrl.u32 %v274, 7
          %v276 = vsub.s32 %v273, %v275
          %v277 = vrot.slane %v269, %v276
          %v279 = vunpack.c.l.s4 1983009808
          %v280 = vunpack.c.0.s8 %v279
          %v281 = vlaneseq
          %v282 = vshrl.u32 %v281, 7
          %v283 = vsub.s32 %v280, %v282
          %v284 = vrot.slane %v270, %v283
          %v285 = vcombine.low %v266, %v268
          %v286 = vcombine.high %v266, %v268
          %v288 = vunpack.c.l.s4 1983009808
          %v289 = vunpack.c.0.s8 %v288
          %v290 = vlaneseq
          %v291 = vshrl.u32 %v290, 7
          %v292 = vsub.s32 %v289, %v291
          %v293 = vrot.slane %v285, %v292
          %v295 = vunpack.c.l.s4 1983009808
          %v296 = vunpack.c.0.s8 %v295
          %v297 = vlaneseq
          %v298 = vshrl.u32 %v297, 7
          %v299 = vsub.s32 %v296, %v298
          %v300 = vrot.slane %v286, %v299
          %v301 = vcombine.low %v277, %v293
          %v302 = vcombine.high %v277, %v293
          %v304 = vunpack.c.l.s4 1934713408
          %v305 = vunpack.c.0.s8 %v304
          %v306 = vlaneseq
          %v307 = vshrl.u32 %v306, 7
          %v308 = vsub.s32 %v305, %v307
          %v309 = vrot.slane %v301, %v308
          %v311 = vunpack.c.l.s4 1934713408
          %v312 = vunpack.c.0.s8 %v311
          %v313 = vlaneseq
          %v314 = vshrl.u32 %v313, 7
          %v315 = vsub.s32 %v312, %v314
          %v316 = vrot.slane %v302, %v315
          %v317 = vcombine.low %v284, %v300
          %v319 = vunpack.c.l.s4 1934713408
          %v320 = vunpack.c.0.s8 %v319
          %v321 = vlaneseq
          %v322 = vshrl.u32 %v321, 7
          %v323 = vsub.s32 %v320, %v322
          %v324 = vrot.slane %v317, %v323
          %v325 = vcombine.high %v309, 0.0
          %v326 = vcombine.high %v316, 0.0
          %v327 = vcombine.high %v324, 0.0
          %329 = vrot.lane.b32.xlu0 %v325, 14
          %v330 = vpop.permute.xlu0 %329
          %333 = vrot.lane.b32.xlu0 %v316, 28
          %v334 = vpop.permute.xlu0 %333
          %337 = vrot.lane.b32.xlu0 %v326, 42
          %v338 = vpop.permute.xlu0 %337
          %341 = vrot.lane.b32.xlu0 %v324, 56
          %v342 = vpop.permute.xlu0 %341
          %345 = vrot.lane.b32.xlu0 %v327, 70
          %v346 = vpop.permute.xlu0 %345
          %vm348 = vcmask 113664
          %v349 = vsel %vm348, %v309, %v330
          %vm350 = vcmask 228352
          %v351 = vsel %vm350, %v349, %v334
          %vm352 = vcmask 343040
          %v353 = vsel %vm352, %v351, %v338
          %vm354 = vcmask 457728
          %v355 = vsel %vm354, %v353, %v342
          %vm356 = vcmask 572416
          %v357 = vsel %vm356, %v355, %v346
          %vm358 = vcmask 683008
          %359 = vst.msk [vmem:[#allocation2] sm:$0xf] %vm358, %v357
          %364 = vrot.lane.b32.xlu0 %v265, 127
          %v365 = vpop.permute.xlu0 %364
          %366 = vrot.lane.b32.xlu0 %v266, 127
          %v367 = vpop.permute.xlu0 %366
          %368 = vrot.lane.b32.xlu0 %v267, 127
          %v369 = vpop.permute.xlu0 %368
          %370 = vrot.lane.b32.xlu0 %v268, 127
          %v371 = vpop.permute.xlu0 %370
          %v376 = vcombine.low %v365, %v369
          %v377 = vcombine.high %v365, %v369
          %v379 = vunpack.c.l.s4 1983009808
          %v380 = vunpack.c.0.s8 %v379
          %v381 = vlaneseq
          %v382 = vshrl.u32 %v381, 7
          %v383 = vsub.s32 %v380, %v382
          %v384 = vrot.slane %v376, %v383
          %v386 = vunpack.c.l.s4 1983009808
          %v387 = vunpack.c.0.s8 %v386
          %v388 = vlaneseq
          %v389 = vshrl.u32 %v388, 7
          %v390 = vsub.s32 %v387, %v389
          %v391 = vrot.slane %v377, %v390
          %v392 = vcombine.low %v367, %v371
          %v393 = vcombine.high %v367, %v371
          %v395 = vunpack.c.l.s4 1983009808
          %v396 = vunpack.c.0.s8 %v395
          %v397 = vlaneseq
          %v398 = vshrl.u32 %v397, 7
          %v399 = vsub.s32 %v396, %v398
          %v400 = vrot.slane %v392, %v399
          %v402 = vunpack.c.l.s4 1983009808
          %v403 = vunpack.c.0.s8 %v402
          %v404 = vlaneseq
          %v405 = vshrl.u32 %v404, 7
          %v406 = vsub.s32 %v403, %v405
          %v407 = vrot.slane %v393, %v406
          %v408 = vcombine.low %v384, %v400
          %v409 = vcombine.high %v384, %v400
          %v411 = vunpack.c.l.s4 1934713408
          %v412 = vunpack.c.0.s8 %v411
          %v413 = vlaneseq
          %v414 = vshrl.u32 %v413, 7
          %v415 = vsub.s32 %v412, %v414
          %v416 = vrot.slane %v408, %v415
          %v418 = vunpack.c.l.s4 1934713408
          %v419 = vunpack.c.0.s8 %v418
          %v420 = vlaneseq
          %v421 = vshrl.u32 %v420, 7
          %v422 = vsub.s32 %v419, %v421
          %v423 = vrot.slane %v409, %v422
          %v424 = vcombine.low %v391, %v407
          %v426 = vunpack.c.l.s4 1934713408
          %v427 = vunpack.c.0.s8 %v426
          %v428 = vlaneseq
          %v429 = vshrl.u32 %v428, 7
          %v430 = vsub.s32 %v427, %v429
          %v431 = vrot.slane %v424, %v430
          %v432 = vcombine.high %v416, 0.0
          %v433 = vcombine.high %v423, 0.0
          %v434 = vcombine.high %v431, 0.0
          %436 = vrot.lane.b32.xlu0 %v432, 14
          %v437 = vpop.permute.xlu0 %436
          %440 = vrot.lane.b32.xlu0 %v423, 28
          %v441 = vpop.permute.xlu0 %440
          %444 = vrot.lane.b32.xlu0 %v433, 42
          %v445 = vpop.permute.xlu0 %444
          %448 = vrot.lane.b32.xlu0 %v431, 56
          %v449 = vpop.permute.xlu0 %448
          %452 = vrot.lane.b32.xlu0 %v434, 70
          %v453 = vpop.permute.xlu0 %452
          %v455 = vsel %vm348, %v416, %v437
          %v456 = vsel %vm350, %v455, %v441
          %v457 = vsel %vm352, %v456, %v445
          %v458 = vsel %vm354, %v457, %v449
          %v459 = vsel %vm356, %v458, %v453
          %v461 = vrot.slane %v459, 4
          %vm463 = vcmask 687108
          %464 = vst.msk [vmem:[#allocation2] sm:$0xf0] %vm463, %v461
          %465 = vrot.lane.b32.xlu0 %v265, 126
          %v466 = vpop.permute.xlu0 %465
          %467 = vrot.lane.b32.xlu0 %v266, 126
          %v468 = vpop.permute.xlu0 %467
          %469 = vrot.lane.b32.xlu0 %v267, 126
          %v470 = vpop.permute.xlu0 %469
          %471 = vrot.lane.b32.xlu0 %v268, 126
          %v472 = vpop.permute.xlu0 %471
          %v477 = vcombine.low %v466, %v470
          %v478 = vcombine.high %v466, %v470
          %v480 = vunpack.c.l.s4 1983009808
          %v481 = vunpack.c.0.s8 %v480
          %v482 = vlaneseq
          %v483 = vshrl.u32 %v482, 7
          %v484 = vsub.s32 %v481, %v483
          %v485 = vrot.slane %v477, %v484
          %v487 = vunpack.c.l.s4 1983009808
          %v488 = vunpack.c.0.s8 %v487
          %v489 = vlaneseq
          %v490 = vshrl.u32 %v489, 7
          %v491 = vsub.s32 %v488, %v490
          %v492 = vrot.slane %v478, %v491
          %v493 = vcombine.low %v468, %v472
          %v494 = vcombine.high %v468, %v472
          %v496 = vunpack.c.l.s4 1983009808
          %v497 = vunpack.c.0.s8 %v496
          %v498 = vlaneseq
          %v499 = vshrl.u32 %v498, 7
          %v500 = vsub.s32 %v497, %v499
          %v501 = vrot.slane %v493, %v500
          %v503 = vunpack.c.l.s4 1983009808
          %v504 = vunpack.c.0.s8 %v503
          %v505 = vlaneseq
          %v506 = vshrl.u32 %v505, 7
          %v507 = vsub.s32 %v504, %v506
          %v508 = vrot.slane %v494, %v507
          %v509 = vcombine.low %v485, %v501
          %v510 = vcombine.high %v485, %v501
          %v512 = vunpack.c.l.s4 1934713408
          %v513 = vunpack.c.0.s8 %v512
          %v514 = vlaneseq
          %v515 = vshrl.u32 %v514, 7
          %v516 = vsub.s32 %v513, %v515
          %v517 = vrot.slane %v509, %v516
          %v519 = vunpack.c.l.s4 1934713408
          %v520 = vunpack.c.0.s8 %v519
          %v521 = vlaneseq
          %v522 = vshrl.u32 %v521, 7
          %v523 = vsub.s32 %v520, %v522
          %v524 = vrot.slane %v510, %v523
          %v525 = vcombine.low %v492, %v508
          %v527 = vunpack.c.l.s4 1934713408
          %v528 = vunpack.c.0.s8 %v527
          %v529 = vlaneseq
          %v530 = vshrl.u32 %v529, 7
          %v531 = vsub.s32 %v528, %v530
          %v532 = vrot.slane %v525, %v531
          %v533 = vcombine.high %v517, 0.0
          %v534 = vcombine.high %v524, 0.0
          %v535 = vcombine.high %v532, 0.0
          %537 = vrot.lane.b32.xlu0 %v533, 14
          %v538 = vpop.permute.xlu0 %537
          %541 = vrot.lane.b32.xlu0 %v524, 28
          %v542 = vpop.permute.xlu0 %541
          %545 = vrot.lane.b32.xlu0 %v534, 42
          %v546 = vpop.permute.xlu0 %545
          %549 = vrot.lane.b32.xlu0 %v532, 56
          %v550 = vpop.permute.xlu0 %549
          %553 = vrot.lane.b32.xlu0 %v535, 70
          %v554 = vpop.permute.xlu0 %553
          %v556 = vsel %vm348, %v517, %v538
          %v557 = vsel %vm350, %v556, %v542
          %v558 = vsel %vm352, %v557, %v546
          %v559 = vsel %vm354, %v558, %v550
          %v560 = vsel %vm356, %v559, %v554
          %561 = vst.msk [vmem:[#allocation2 + $0x10] sm:$0xf] %vm358, %v560
          %v562 = vrot.slane %v265, 1
          %v563 = vrot.slane %v266, 1
          %v564 = vrot.slane %v267, 1
          %v565 = vrot.slane %v268, 1
          %v570 = vcombine.low %v562, %v564
          %v571 = vcombine.high %v562, %v564
          %v573 = vunpack.c.l.s4 1983009808
          %v574 = vunpack.c.0.s8 %v573
          %v575 = vlaneseq
          %v576 = vshrl.u32 %v575, 7
          %v577 = vsub.s32 %v574, %v576
          %v578 = vrot.slane %v570, %v577
          %v580 = vunpack.c.l.s4 1983009808
          %v581 = vunpack.c.0.s8 %v580
          %v582 = vlaneseq
          %v583 = vshrl.u32 %v582, 7
          %v584 = vsub.s32 %v581, %v583
          %v585 = vrot.slane %v571, %v584
          %v586 = vcombine.low %v563, %v565
          %v587 = vcombine.high %v563, %v565
          %v589 = vunpack.c.l.s4 1983009808
          %v590 = vunpack.c.0.s8 %v589
          %v591 = vlaneseq
          %v592 = vshrl.u32 %v591, 7
          %v593 = vsub.s32 %v590, %v592
          %v594 = vrot.slane %v586, %v593
          %v596 = vunpack.c.l.s4 1983009808
          %v597 = vunpack.c.0.s8 %v596
          %v598 = vlaneseq
          %v599 = vshrl.u32 %v598, 7
          %v600 = vsub.s32 %v597, %v599
          %v601 = vrot.slane %v587, %v600
          %v602 = vcombine.low %v578, %v594
          %v603 = vcombine.high %v578, %v594
          %v605 = vunpack.c.l.s4 1934713408
          %v606 = vunpack.c.0.s8 %v605
          %v607 = vlaneseq
          %v608 = vshrl.u32 %v607, 7
          %v609 = vsub.s32 %v606, %v608
          %v610 = vrot.slane %v602, %v609
          %v612 = vunpack.c.l.s4 1934713408
          %v613 = vunpack.c.0.s8 %v612
          %v614 = vlaneseq
          %v615 = vshrl.u32 %v614, 7
          %v616 = vsub.s32 %v613, %v615
          %v617 = vrot.slane %v603, %v616
          %v618 = vcombine.low %v585, %v601
          %v620 = vunpack.c.l.s4 1934713408
          %v621 = vunpack.c.0.s8 %v620
          %v622 = vlaneseq
          %v623 = vshrl.u32 %v622, 7
          %v624 = vsub.s32 %v621, %v623
          %v625 = vrot.slane %v618, %v624
          %v626 = vcombine.high %v610, 0.0
          %v627 = vcombine.high %v617, 0.0
          %v628 = vcombine.high %v625, 0.0
          %630 = vrot.lane.b32.xlu0 %v626, 14
          %v631 = vpop.permute.xlu0 %630
          %634 = vrot.lane.b32.xlu0 %v617, 28
          %v635 = vpop.permute.xlu0 %634
          %638 = vrot.lane.b32.xlu0 %v627, 42
          %v639 = vpop.permute.xlu0 %638
          %642 = vrot.lane.b32.xlu0 %v625, 56
          %v643 = vpop.permute.xlu0 %642
          %646 = vrot.lane.b32.xlu0 %v628, 70
          %v647 = vpop.permute.xlu0 %646
          %v649 = vsel %vm348, %v610, %v631
          %v650 = vsel %vm350, %v649, %v635
          %v651 = vsel %vm352, %v650, %v639
          %v652 = vsel %vm354, %v651, %v643
          %v653 = vsel %vm356, %v652, %v647
          %v655 = vrot.slane %v653, 4
          %657 = vst.msk [vmem:[#allocation2 + $0x10] sm:$0xf0] %vm463, %v655
          %658 = vrot.lane.b32.xlu0 %v562, 127
          %v659 = vpop.permute.xlu0 %658
          %660 = vrot.lane.b32.xlu0 %v563, 127
          %v661 = vpop.permute.xlu0 %660
          %662 = vrot.lane.b32.xlu0 %v564, 127
          %v663 = vpop.permute.xlu0 %662
          %664 = vrot.lane.b32.xlu0 %v565, 127
          %v665 = vpop.permute.xlu0 %664
          %v670 = vcombine.low %v659, %v663
          %v671 = vcombine.high %v659, %v663
          %v673 = vunpack.c.l.s4 1983009808
          %v674 = vunpack.c.0.s8 %v673
          %v675 = vlaneseq
          %v676 = vshrl.u32 %v675, 7
          %v677 = vsub.s32 %v674, %v676
          %v678 = vrot.slane %v670, %v677
          %v680 = vunpack.c.l.s4 1983009808
          %v681 = vunpack.c.0.s8 %v680
          %v682 = vlaneseq
          %v683 = vshrl.u32 %v682, 7
          %v684 = vsub.s32 %v681, %v683
          %v685 = vrot.slane %v671, %v684
          %v686 = vcombine.low %v661, %v665
          %v687 = vcombine.high %v661, %v665
          %v689 = vunpack.c.l.s4 1983009808
          %v690 = vunpack.c.0.s8 %v689
          %v691 = vlaneseq
          %v692 = vshrl.u32 %v691, 7
          %v693 = vsub.s32 %v690, %v692
          %v694 = vrot.slane %v686, %v693
          %v696 = vunpack.c.l.s4 1983009808
          %v697 = vunpack.c.0.s8 %v696
          %v698 = vlaneseq
          %v699 = vshrl.u32 %v698, 7
          %v700 = vsub.s32 %v697, %v699
          %v701 = vrot.slane %v687, %v700
          %v702 = vcombine.low %v678, %v694
          %v703 = vcombine.high %v678, %v694
          %v705 = vunpack.c.l.s4 1934713408
          %v706 = vunpack.c.0.s8 %v705
          %v707 = vlaneseq
          %v708 = vshrl.u32 %v707, 7
          %v709 = vsub.s32 %v706, %v708
          %v710 = vrot.slane %v702, %v709
          %v712 = vunpack.c.l.s4 1934713408
          %v713 = vunpack.c.0.s8 %v712
          %v714 = vlaneseq
          %v715 = vshrl.u32 %v714, 7
          %v716 = vsub.s32 %v713, %v715
          %v717 = vrot.slane %v703, %v716
          %v718 = vcombine.low %v685, %v701
          %v720 = vunpack.c.l.s4 1934713408
          %v721 = vunpack.c.0.s8 %v720
          %v722 = vlaneseq
          %v723 = vshrl.u32 %v722, 7
          %v724 = vsub.s32 %v721, %v723
          %v725 = vrot.slane %v718, %v724
          %v726 = vcombine.high %v710, 0.0
          %v727 = vcombine.high %v717, 0.0
          %v728 = vcombine.high %v725, 0.0
          %730 = vrot.lane.b32.xlu0 %v726, 14
          %v731 = vpop.permute.xlu0 %730
          %734 = vrot.lane.b32.xlu0 %v717, 28
          %v735 = vpop.permute.xlu0 %734
          %738 = vrot.lane.b32.xlu0 %v727, 42
          %v739 = vpop.permute.xlu0 %738
          %742 = vrot.lane.b32.xlu0 %v725, 56
          %v743 = vpop.permute.xlu0 %742
          %746 = vrot.lane.b32.xlu0 %v728, 70
          %v747 = vpop.permute.xlu0 %746
          %v749 = vsel %vm348, %v710, %v731
          %v750 = vsel %vm350, %v749, %v735
          %v751 = vsel %vm352, %v750, %v739
          %v752 = vsel %vm354, %v751, %v743
          %v753 = vsel %vm356, %v752, %v747
          %754 = vst.msk [vmem:[#allocation2 + $0x20] sm:$0xf] %vm358, %v753
          %755 = vrot.lane.b32.xlu0 %v562, 126
          %v756 = vpop.permute.xlu0 %755
          %757 = vrot.lane.b32.xlu0 %v563, 126
          %v758 = vpop.permute.xlu0 %757
          %759 = vrot.lane.b32.xlu0 %v564, 126
          %v760 = vpop.permute.xlu0 %759
          %761 = vrot.lane.b32.xlu0 %v565, 126
          %v762 = vpop.permute.xlu0 %761
          %v767 = vcombine.low %v756, %v760
          %v768 = vcombine.high %v756, %v760
          %v770 = vunpack.c.l.s4 1983009808
          %v771 = vunpack.c.0.s8 %v770
          %v772 = vlaneseq
          %v773 = vshrl.u32 %v772, 7
          %v774 = vsub.s32 %v771, %v773
          %v775 = vrot.slane %v767, %v774
          %v777 = vunpack.c.l.s4 1983009808
          %v778 = vunpack.c.0.s8 %v777
          %v779 = vlaneseq
          %v780 = vshrl.u32 %v779, 7
          %v781 = vsub.s32 %v778, %v780
          %v782 = vrot.slane %v768, %v781
          %v783 = vcombine.low %v758, %v762
          %v784 = vcombine.high %v758, %v762
          %v786 = vunpack.c.l.s4 1983009808
          %v787 = vunpack.c.0.s8 %v786
          %v788 = vlaneseq
          %v789 = vshrl.u32 %v788, 7
          %v790 = vsub.s32 %v787, %v789
          %v791 = vrot.slane %v783, %v790
          %v793 = vunpack.c.l.s4 1983009808
          %v794 = vunpack.c.0.s8 %v793
          %v795 = vlaneseq
          %v796 = vshrl.u32 %v795, 7
          %v797 = vsub.s32 %v794, %v796
          %v798 = vrot.slane %v784, %v797
          %v799 = vcombine.low %v775, %v791
          %v800 = vcombine.high %v775, %v791
          %v802 = vunpack.c.l.s4 1934713408
          %v803 = vunpack.c.0.s8 %v802
          %v804 = vlaneseq
          %v805 = vshrl.u32 %v804, 7
          %v806 = vsub.s32 %v803, %v805
          %v807 = vrot.slane %v799, %v806
          %v809 = vunpack.c.l.s4 1934713408
          %v810 = vunpack.c.0.s8 %v809
          %v811 = vlaneseq
          %v812 = vshrl.u32 %v811, 7
          %v813 = vsub.s32 %v810, %v812
          %v814 = vrot.slane %v800, %v813
          %v815 = vcombine.low %v782, %v798
          %v817 = vunpack.c.l.s4 1934713408
          %v818 = vunpack.c.0.s8 %v817
          %v819 = vlaneseq
          %v820 = vshrl.u32 %v819, 7
          %v821 = vsub.s32 %v818, %v820
          %v822 = vrot.slane %v815, %v821
          %v823 = vcombine.high %v807, 0.0
          %v824 = vcombine.high %v814, 0.0
          %v825 = vcombine.high %v822, 0.0
          %827 = vrot.lane.b32.xlu0 %v823, 14
          %v828 = vpop.permute.xlu0 %827
          %831 = vrot.lane.b32.xlu0 %v814, 28
          %v832 = vpop.permute.xlu0 %831
          %835 = vrot.lane.b32.xlu0 %v824, 42
          %v836 = vpop.permute.xlu0 %835
          %839 = vrot.lane.b32.xlu0 %v822, 56
          %v840 = vpop.permute.xlu0 %839
          %843 = vrot.lane.b32.xlu0 %v825, 70
          %v844 = vpop.permute.xlu0 %843
          %v846 = vsel %vm348, %v807, %v828
          %v847 = vsel %vm350, %v846, %v832
          %v848 = vsel %vm352, %v847, %v836
          %v849 = vsel %vm354, %v848, %v840
          %v850 = vsel %vm356, %v849, %v844
          %v852 = vrot.slane %v850, 4
          %854 = vst.msk [vmem:[#allocation2 + $0x20] sm:$0xf0] %vm463, %v852
          %v855 = vrot.slane %v265, 2
          %v856 = vrot.slane %v266, 2
          %v857 = vrot.slane %v267, 2
          %v858 = vrot.slane %v268, 2
          %v863 = vcombine.low %v855, %v857
          %v864 = vcombine.high %v855, %v857
          %v866 = vunpack.c.l.s4 1983009808
          %v867 = vunpack.c.0.s8 %v866
          %v868 = vlaneseq
          %v869 = vshrl.u32 %v868, 7
          %v870 = vsub.s32 %v867, %v869
          %v871 = vrot.slane %v863, %v870
          %v873 = vunpack.c.l.s4 1983009808
          %v874 = vunpack.c.0.s8 %v873
          %v875 = vlaneseq
          %v876 = vshrl.u32 %v875, 7
          %v877 = vsub.s32 %v874, %v876
          %v878 = vrot.slane %v864, %v877
          %v879 = vcombine.low %v856, %v858
          %v880 = vcombine.high %v856, %v858
          %v882 = vunpack.c.l.s4 1983009808
          %v883 = vunpack.c.0.s8 %v882
          %v884 = vlaneseq
          %v885 = vshrl.u32 %v884, 7
          %v886 = vsub.s32 %v883, %v885
          %v887 = vrot.slane %v879, %v886
          %v889 = vunpack.c.l.s4 1983009808
          %v890 = vunpack.c.0.s8 %v889
          %v891 = vlaneseq
          %v892 = vshrl.u32 %v891, 7
          %v893 = vsub.s32 %v890, %v892
          %v894 = vrot.slane %v880, %v893
          %v895 = vcombine.low %v871, %v887
          %v896 = vcombine.high %v871, %v887
          %v898 = vunpack.c.l.s4 1934713408
          %v899 = vunpack.c.0.s8 %v898
          %v900 = vlaneseq
          %v901 = vshrl.u32 %v900, 7
          %v902 = vsub.s32 %v899, %v901
          %v903 = vrot.slane %v895, %v902
          %v905 = vunpack.c.l.s4 1934713408
          %v906 = vunpack.c.0.s8 %v905
          %v907 = vlaneseq
          %v908 = vshrl.u32 %v907, 7
          %v909 = vsub.s32 %v906, %v908
          %v910 = vrot.slane %v896, %v909
          %v911 = vcombine.low %v878, %v894
          %v913 = vunpack.c.l.s4 1934713408
          %v914 = vunpack.c.0.s8 %v913
          %v915 = vlaneseq
          %v916 = vshrl.u32 %v915, 7
          %v917 = vsub.s32 %v914, %v916
          %v918 = vrot.slane %v911, %v917
          %v919 = vcombine.high %v903, 0.0
          %v920 = vcombine.high %v910, 0.0
          %v921 = vcombine.high %v918, 0.0
          %923 = vrot.lane.b32.xlu0 %v919, 14
          %v924 = vpop.permute.xlu0 %923
          %927 = vrot.lane.b32.xlu0 %v910, 28
          %v928 = vpop.permute.xlu0 %927
          %931 = vrot.lane.b32.xlu0 %v920, 42
          %v932 = vpop.permute.xlu0 %931
          %935 = vrot.lane.b32.xlu0 %v918, 56
          %v936 = vpop.permute.xlu0 %935
          %939 = vrot.lane.b32.xlu0 %v921, 70
          %v940 = vpop.permute.xlu0 %939
          %v942 = vsel %vm348, %v903, %v924
          %v943 = vsel %vm350, %v942, %v928
          %v944 = vsel %vm352, %v943, %v932
          %v945 = vsel %vm354, %v944, %v936
          %v946 = vsel %vm356, %v945, %v940
          %947 = vst.msk [vmem:[#allocation2 + $0x30] sm:$0xf] %vm358, %v946
          %948 = vrot.lane.b32.xlu0 %v855, 127
          %v949 = vpop.permute.xlu0 %948
          %950 = vrot.lane.b32.xlu0 %v856, 127
          %v951 = vpop.permute.xlu0 %950
          %952 = vrot.lane.b32.xlu0 %v857, 127
          %v953 = vpop.permute.xlu0 %952
          %954 = vrot.lane.b32.xlu0 %v858, 127
          %v955 = vpop.permute.xlu0 %954
          %v960 = vcombine.low %v949, %v953
          %v961 = vcombine.high %v949, %v953
          %v963 = vunpack.c.l.s4 1983009808
          %v964 = vunpack.c.0.s8 %v963
          %v965 = vlaneseq
          %v966 = vshrl.u32 %v965, 7
          %v967 = vsub.s32 %v964, %v966
          %v968 = vrot.slane %v960, %v967
          %v970 = vunpack.c.l.s4 1983009808
          %v971 = vunpack.c.0.s8 %v970
          %v972 = vlaneseq
          %v973 = vshrl.u32 %v972, 7
          %v974 = vsub.s32 %v971, %v973
          %v975 = vrot.slane %v961, %v974
          %v976 = vcombine.low %v951, %v955
          %v977 = vcombine.high %v951, %v955
          %v979 = vunpack.c.l.s4 1983009808
          %v980 = vunpack.c.0.s8 %v979
          %v981 = vlaneseq
          %v982 = vshrl.u32 %v981, 7
          %v983 = vsub.s32 %v980, %v982
          %v984 = vrot.slane %v976, %v983
          %v986 = vunpack.c.l.s4 1983009808
          %v987 = vunpack.c.0.s8 %v986
          %v988 = vlaneseq
          %v989 = vshrl.u32 %v988, 7
          %v990 = vsub.s32 %v987, %v989
          %v991 = vrot.slane %v977, %v990
          %v992 = vcombine.low %v968, %v984
          %v993 = vcombine.high %v968, %v984
          %v995 = vunpack.c.l.s4 1934713408
          %v996 = vunpack.c.0.s8 %v995
          %v997 = vlaneseq
          %v998 = vshrl.u32 %v997, 7
          %v999 = vsub.s32 %v996, %v998
          %v1000 = vrot.slane %v992, %v999
          %v1002 = vunpack.c.l.s4 1934713408
          %v1003 = vunpack.c.0.s8 %v1002
          %v1004 = vlaneseq
          %v1005 = vshrl.u32 %v1004, 7
          %v1006 = vsub.s32 %v1003, %v1005
          %v1007 = vrot.slane %v993, %v1006
          %v1008 = vcombine.low %v975, %v991
          %v1010 = vunpack.c.l.s4 1934713408
          %v1011 = vunpack.c.0.s8 %v1010
          %v1012 = vlaneseq
          %v1013 = vshrl.u32 %v1012, 7
          %v1014 = vsub.s32 %v1011, %v1013
          %v1015 = vrot.slane %v1008, %v1014
          %v1016 = vcombine.high %v1000, 0.0
          %v1017 = vcombine.high %v1007, 0.0
          %v1018 = vcombine.high %v1015, 0.0
          %1020 = vrot.lane.b32.xlu0 %v1016, 14
          %v1021 = vpop.permute.xlu0 %1020
          %1024 = vrot.lane.b32.xlu0 %v1007, 28
          %v1025 = vpop.permute.xlu0 %1024
          %1028 = vrot.lane.b32.xlu0 %v1017, 42
          %v1029 = vpop.permute.xlu0 %1028
          %1032 = vrot.lane.b32.xlu0 %v1015, 56
          %v1033 = vpop.permute.xlu0 %1032
          %1036 = vrot.lane.b32.xlu0 %v1018, 70
          %v1037 = vpop.permute.xlu0 %1036
          %v1039 = vsel %vm348, %v1000, %v1021
          %v1040 = vsel %vm350, %v1039, %v1025
          %v1041 = vsel %vm352, %v1040, %v1029
          %v1042 = vsel %vm354, %v1041, %v1033
          %v1043 = vsel %vm356, %v1042, %v1037
          %v1045 = vrot.slane %v1043, 4
          %1047 = vst.msk [vmem:[#allocation2 + $0x30] sm:$0xf0] %vm463, %v1045
          %1048 = vrot.lane.b32.xlu0 %v855, 126
          %v1049 = vpop.permute.xlu0 %1048
          %1050 = vrot.lane.b32.xlu0 %v856, 126
          %v1051 = vpop.permute.xlu0 %1050
          %1052 = vrot.lane.b32.xlu0 %v857, 126
          %v1053 = vpop.permute.xlu0 %1052
          %1054 = vrot.lane.b32.xlu0 %v858, 126
          %v1055 = vpop.permute.xlu0 %1054
          %v1060 = vcombine.low %v1049, %v1053
          %v1061 = vcombine.high %v1049, %v1053
          %v1063 = vunpack.c.l.s4 1983009808
          %v1064 = vunpack.c.0.s8 %v1063
          %v1065 = vlaneseq
          %v1066 = vshrl.u32 %v1065, 7
          %v1067 = vsub.s32 %v1064, %v1066
          %v1068 = vrot.slane %v1060, %v1067
          %v1070 = vunpack.c.l.s4 1983009808
          %v1071 = vunpack.c.0.s8 %v1070
          %v1072 = vlaneseq
          %v1073 = vshrl.u32 %v1072, 7
          %v1074 = vsub.s32 %v1071, %v1073
          %v1075 = vrot.slane %v1061, %v1074
          %v1076 = vcombine.low %v1051, %v1055
          %v1077 = vcombine.high %v1051, %v1055
          %v1079 = vunpack.c.l.s4 1983009808
          %v1080 = vunpack.c.0.s8 %v1079
          %v1081 = vlaneseq
          %v1082 = vshrl.u32 %v1081, 7
          %v1083 = vsub.s32 %v1080, %v1082
          %v1084 = vrot.slane %v1076, %v1083
          %v1086 = vunpack.c.l.s4 1983009808
          %v1087 = vunpack.c.0.s8 %v1086
          %v1088 = vlaneseq
          %v1089 = vshrl.u32 %v1088, 7
          %v1090 = vsub.s32 %v1087, %v1089
          %v1091 = vrot.slane %v1077, %v1090
          %v1092 = vcombine.low %v1068, %v1084
          %v1093 = vcombine.high %v1068, %v1084
          %v1095 = vunpack.c.l.s4 1934713408
          %v1096 = vunpack.c.0.s8 %v1095
          %v1097 = vlaneseq
          %v1098 = vshrl.u32 %v1097, 7
          %v1099 = vsub.s32 %v1096, %v1098
          %v1100 = vrot.slane %v1092, %v1099
          %v1102 = vunpack.c.l.s4 1934713408
          %v1103 = vunpack.c.0.s8 %v1102
          %v1104 = vlaneseq
          %v1105 = vshrl.u32 %v1104, 7
          %v1106 = vsub.s32 %v1103, %v1105
          %v1107 = vrot.slane %v1093, %v1106
          %v1108 = vcombine.low %v1075, %v1091
          %v1110 = vunpack.c.l.s4 1934713408
          %v1111 = vunpack.c.0.s8 %v1110
          %v1112 = vlaneseq
          %v1113 = vshrl.u32 %v1112, 7
          %v1114 = vsub.s32 %v1111, %v1113
          %v1115 = vrot.slane %v1108, %v1114
          %v1116 = vcombine.high %v1100, 0.0
          %v1117 = vcombine.high %v1107, 0.0
          %v1118 = vcombine.high %v1115, 0.0
          %1120 = vrot.lane.b32.xlu0 %v1116, 14
          %v1121 = vpop.permute.xlu0 %1120
          %1124 = vrot.lane.b32.xlu0 %v1107, 28
          %v1125 = vpop.permute.xlu0 %1124
          %1128 = vrot.lane.b32.xlu0 %v1117, 42
          %v1129 = vpop.permute.xlu0 %1128
          %1132 = vrot.lane.b32.xlu0 %v1115, 56
          %v1133 = vpop.permute.xlu0 %1132
          %1136 = vrot.lane.b32.xlu0 %v1118, 70
          %v1137 = vpop.permute.xlu0 %1136
          %v1139 = vsel %vm348, %v1100, %v1121
          %v1140 = vsel %vm350, %v1139, %v1125
          %v1141 = vsel %vm352, %v1140, %v1129
          %v1142 = vsel %vm354, %v1141, %v1133
          %v1143 = vsel %vm356, %v1142, %v1137
          %1144 = vst.msk [vmem:[#allocation2 + $0x40] sm:$0xf] %vm358, %v1143
          %s1145 = scalar_lea.vmem %s203, 32 [#allocation3]
          %v1146 = vld [vmem:[%s1145] sm:$0xff]
          %v1147 = vld [vmem:[%s1145 + $0x8] sm:$0xff]
          %v1148 = vld [vmem:[%s1145 + $0x10] sm:$0xff]
          %v1149 = vld [vmem:[%s1145 + $0x18] sm:$0xff]
          %v1150 = vcombine.low %v1146, %v1148
          %v1151 = vcombine.high %v1146, %v1148
          %v1153 = vunpack.c.l.s4 1983009808
          %v1154 = vunpack.c.0.s8 %v1153
          %v1155 = vlaneseq
          %v1156 = vshrl.u32 %v1155, 7
          %v1157 = vsub.s32 %v1154, %v1156
          %v1158 = vrot.slane %v1150, %v1157
          %v1160 = vunpack.c.l.s4 1983009808
          %v1161 = vunpack.c.0.s8 %v1160
          %v1162 = vlaneseq
          %v1163 = vshrl.u32 %v1162, 7
          %v1164 = vsub.s32 %v1161, %v1163
          %v1165 = vrot.slane %v1151, %v1164
          %v1166 = vcombine.low %v1147, %v1149
          %v1167 = vcombine.high %v1147, %v1149
          %v1169 = vunpack.c.l.s4 1983009808
          %v1170 = vunpack.c.0.s8 %v1169
          %v1171 = vlaneseq
          %v1172 = vshrl.u32 %v1171, 7
          %v1173 = vsub.s32 %v1170, %v1172
          %v1174 = vrot.slane %v1166, %v1173
          %v1176 = vunpack.c.l.s4 1983009808
          %v1177 = vunpack.c.0.s8 %v1176
          %v1178 = vlaneseq
          %v1179 = vshrl.u32 %v1178, 7
          %v1180 = vsub.s32 %v1177, %v1179
          %v1181 = vrot.slane %v1167, %v1180
          %v1182 = vcombine.low %v1158, %v1174
          %v1183 = vcombine.high %v1158, %v1174
          %v1185 = vunpack.c.l.s4 1934713408
          %v1186 = vunpack.c.0.s8 %v1185
          %v1187 = vlaneseq
          %v1188 = vshrl.u32 %v1187, 7
          %v1189 = vsub.s32 %v1186, %v1188
          %v1190 = vrot.slane %v1182, %v1189
          %v1192 = vunpack.c.l.s4 1934713408
          %v1193 = vunpack.c.0.s8 %v1192
          %v1194 = vlaneseq
          %v1195 = vshrl.u32 %v1194, 7
          %v1196 = vsub.s32 %v1193, %v1195
          %v1197 = vrot.slane %v1183, %v1196
          %v1198 = vcombine.low %v1165, %v1181
          %v1200 = vunpack.c.l.s4 1934713408
          %v1201 = vunpack.c.0.s8 %v1200
          %v1202 = vlaneseq
          %v1203 = vshrl.u32 %v1202, 7
          %v1204 = vsub.s32 %v1201, %v1203
          %v1205 = vrot.slane %v1198, %v1204
          %v1206 = vcombine.high %v1190, 0.0
          %v1207 = vcombine.high %v1197, 0.0
          %v1208 = vcombine.high %v1205, 0.0
          %1210 = vrot.lane.b32.xlu0 %v1206, 14
          %v1211 = vpop.permute.xlu0 %1210
          %1214 = vrot.lane.b32.xlu0 %v1197, 28
          %v1215 = vpop.permute.xlu0 %1214
          %1218 = vrot.lane.b32.xlu0 %v1207, 42
          %v1219 = vpop.permute.xlu0 %1218
          %1222 = vrot.lane.b32.xlu0 %v1205, 56
          %v1223 = vpop.permute.xlu0 %1222
          %1226 = vrot.lane.b32.xlu0 %v1208, 70
          %v1227 = vpop.permute.xlu0 %1226
          %v1229 = vsel %vm348, %v1190, %v1211
          %v1230 = vsel %vm350, %v1229, %v1215
          %v1231 = vsel %vm352, %v1230, %v1219
          %v1232 = vsel %vm354, %v1231, %v1223
          %v1233 = vsel %vm356, %v1232, %v1227
          %1234 = vst.msk [vmem:[#allocation2 + $0x8] sm:$0xf] %vm358, %v1233
          %1239 = vrot.lane.b32.xlu0 %v1146, 127
          %v1240 = vpop.permute.xlu0 %1239
          %1241 = vrot.lane.b32.xlu0 %v1147, 127
          %v1242 = vpop.permute.xlu0 %1241
          %1243 = vrot.lane.b32.xlu0 %v1148, 127
          %v1244 = vpop.permute.xlu0 %1243
          %1245 = vrot.lane.b32.xlu0 %v1149, 127
          %v1246 = vpop.permute.xlu0 %1245
          %v1251 = vcombine.low %v1240, %v1244
          %v1252 = vcombine.high %v1240, %v1244
          %v1254 = vunpack.c.l.s4 1983009808
          %v1255 = vunpack.c.0.s8 %v1254
          %v1256 = vlaneseq
          %v1257 = vshrl.u32 %v1256, 7
          %v1258 = vsub.s32 %v1255, %v1257
          %v1259 = vrot.slane %v1251, %v1258
          %v1261 = vunpack.c.l.s4 1983009808
          %v1262 = vunpack.c.0.s8 %v1261
          %v1263 = vlaneseq
          %v1264 = vshrl.u32 %v1263, 7
          %v1265 = vsub.s32 %v1262, %v1264
          %v1266 = vrot.slane %v1252, %v1265
          %v1267 = vcombine.low %v1242, %v1246
          %v1268 = vcombine.high %v1242, %v1246
          %v1270 = vunpack.c.l.s4 1983009808
          %v1271 = vunpack.c.0.s8 %v1270
          %v1272 = vlaneseq
          %v1273 = vshrl.u32 %v1272, 7
          %v1274 = vsub.s32 %v1271, %v1273
          %v1275 = vrot.slane %v1267, %v1274
          %v1277 = vunpack.c.l.s4 1983009808
          %v1278 = vunpack.c.0.s8 %v1277
          %v1279 = vlaneseq
          %v1280 = vshrl.u32 %v1279, 7
          %v1281 = vsub.s32 %v1278, %v1280
          %v1282 = vrot.slane %v1268, %v1281
          %v1283 = vcombine.low %v1259, %v1275
          %v1284 = vcombine.high %v1259, %v1275
          %v1286 = vunpack.c.l.s4 1934713408
          %v1287 = vunpack.c.0.s8 %v1286
          %v1288 = vlaneseq
          %v1289 = vshrl.u32 %v1288, 7
          %v1290 = vsub.s32 %v1287, %v1289
          %v1291 = vrot.slane %v1283, %v1290
          %v1293 = vunpack.c.l.s4 1934713408
          %v1294 = vunpack.c.0.s8 %v1293
          %v1295 = vlaneseq
          %v1296 = vshrl.u32 %v1295, 7
          %v1297 = vsub.s32 %v1294, %v1296
          %v1298 = vrot.slane %v1284, %v1297
          %v1299 = vcombine.low %v1266, %v1282
          %v1301 = vunpack.c.l.s4 1934713408
          %v1302 = vunpack.c.0.s8 %v1301
          %v1303 = vlaneseq
          %v1304 = vshrl.u32 %v1303, 7
          %v1305 = vsub.s32 %v1302, %v1304
          %v1306 = vrot.slane %v1299, %v1305
          %v1307 = vcombine.high %v1291, 0.0
          %v1308 = vcombine.high %v1298, 0.0
          %v1309 = vcombine.high %v1306, 0.0
          %1311 = vrot.lane.b32.xlu0 %v1307, 14
          %v1312 = vpop.permute.xlu0 %1311
          %1315 = vrot.lane.b32.xlu0 %v1298, 28
          %v1316 = vpop.permute.xlu0 %1315
          %1319 = vrot.lane.b32.xlu0 %v1308, 42
          %v1320 = vpop.permute.xlu0 %1319
          %1323 = vrot.lane.b32.xlu0 %v1306, 56
          %v1324 = vpop.permute.xlu0 %1323
          %1327 = vrot.lane.b32.xlu0 %v1309, 70
          %v1328 = vpop.permute.xlu0 %1327
          %v1330 = vsel %vm348, %v1291, %v1312
          %v1331 = vsel %vm350, %v1330, %v1316
          %v1332 = vsel %vm352, %v1331, %v1320
          %v1333 = vsel %vm354, %v1332, %v1324
          %v1334 = vsel %vm356, %v1333, %v1328
          %v1336 = vrot.slane %v1334, 4
          %1338 = vst.msk [vmem:[#allocation2 + $0x8] sm:$0xf0] %vm463, %v1336
          %1339 = vrot.lane.b32.xlu0 %v1146, 126
          %v1340 = vpop.permute.xlu0 %1339
          %1341 = vrot.lane.b32.xlu0 %v1147, 126
          %v1342 = vpop.permute.xlu0 %1341
          %1343 = vrot.lane.b32.xlu0 %v1148, 126
          %v1344 = vpop.permute.xlu0 %1343
          %1345 = vrot.lane.b32.xlu0 %v1149, 126
          %v1346 = vpop.permute.xlu0 %1345
          %v1351 = vcombine.low %v1340, %v1344
          %v1352 = vcombine.high %v1340, %v1344
          %v1354 = vunpack.c.l.s4 1983009808
          %v1355 = vunpack.c.0.s8 %v1354
          %v1356 = vlaneseq
          %v1357 = vshrl.u32 %v1356, 7
          %v1358 = vsub.s32 %v1355, %v1357
          %v1359 = vrot.slane %v1351, %v1358
          %v1361 = vunpack.c.l.s4 1983009808
          %v1362 = vunpack.c.0.s8 %v1361
          %v1363 = vlaneseq
          %v1364 = vshrl.u32 %v1363, 7
          %v1365 = vsub.s32 %v1362, %v1364
          %v1366 = vrot.slane %v1352, %v1365
          %v1367 = vcombine.low %v1342, %v1346
          %v1368 = vcombine.high %v1342, %v1346
          %v1370 = vunpack.c.l.s4 1983009808
          %v1371 = vunpack.c.0.s8 %v1370
          %v1372 = vlaneseq
          %v1373 = vshrl.u32 %v1372, 7
          %v1374 = vsub.s32 %v1371, %v1373
          %v1375 = vrot.slane %v1367, %v1374
          %v1377 = vunpack.c.l.s4 1983009808
          %v1378 = vunpack.c.0.s8 %v1377
          %v1379 = vlaneseq
          %v1380 = vshrl.u32 %v1379, 7
          %v1381 = vsub.s32 %v1378, %v1380
          %v1382 = vrot.slane %v1368, %v1381
          %v1383 = vcombine.low %v1359, %v1375
          %v1384 = vcombine.high %v1359, %v1375
          %v1386 = vunpack.c.l.s4 1934713408
          %v1387 = vunpack.c.0.s8 %v1386
          %v1388 = vlaneseq
          %v1389 = vshrl.u32 %v1388, 7
          %v1390 = vsub.s32 %v1387, %v1389
          %v1391 = vrot.slane %v1383, %v1390
          %v1393 = vunpack.c.l.s4 1934713408
          %v1394 = vunpack.c.0.s8 %v1393
          %v1395 = vlaneseq
          %v1396 = vshrl.u32 %v1395, 7
          %v1397 = vsub.s32 %v1394, %v1396
          %v1398 = vrot.slane %v1384, %v1397
          %v1399 = vcombine.low %v1366, %v1382
          %v1401 = vunpack.c.l.s4 1934713408
          %v1402 = vunpack.c.0.s8 %v1401
          %v1403 = vlaneseq
          %v1404 = vshrl.u32 %v1403, 7
          %v1405 = vsub.s32 %v1402, %v1404
          %v1406 = vrot.slane %v1399, %v1405
          %v1407 = vcombine.high %v1391, 0.0
          %v1408 = vcombine.high %v1398, 0.0
          %v1409 = vcombine.high %v1406, 0.0
          %1411 = vrot.lane.b32.xlu0 %v1407, 14
          %v1412 = vpop.permute.xlu0 %1411
          %1415 = vrot.lane.b32.xlu0 %v1398, 28
          %v1416 = vpop.permute.xlu0 %1415
          %1419 = vrot.lane.b32.xlu0 %v1408, 42
          %v1420 = vpop.permute.xlu0 %1419
          %1423 = vrot.lane.b32.xlu0 %v1406, 56
          %v1424 = vpop.permute.xlu0 %1423
          %1427 = vrot.lane.b32.xlu0 %v1409, 70
          %v1428 = vpop.permute.xlu0 %1427
          %v1430 = vsel %vm348, %v1391, %v1412
          %v1431 = vsel %vm350, %v1430, %v1416
          %v1432 = vsel %vm352, %v1431, %v1420
          %v1433 = vsel %vm354, %v1432, %v1424
          %v1434 = vsel %vm356, %v1433, %v1428
          %1435 = vst.msk [vmem:[#allocation2 + $0x18] sm:$0xf] %vm358, %v1434
          %v1436 = vrot.slane %v1146, 1
          %v1437 = vrot.slane %v1147, 1
          %v1438 = vrot.slane %v1148, 1
          %v1439 = vrot.slane %v1149, 1
          %v1444 = vcombine.low %v1436, %v1438
          %v1445 = vcombine.high %v1436, %v1438
          %v1447 = vunpack.c.l.s4 1983009808
          %v1448 = vunpack.c.0.s8 %v1447
          %v1449 = vlaneseq
          %v1450 = vshrl.u32 %v1449, 7
          %v1451 = vsub.s32 %v1448, %v1450
          %v1452 = vrot.slane %v1444, %v1451
          %v1454 = vunpack.c.l.s4 1983009808
          %v1455 = vunpack.c.0.s8 %v1454
          %v1456 = vlaneseq
          %v1457 = vshrl.u32 %v1456, 7
          %v1458 = vsub.s32 %v1455, %v1457
          %v1459 = vrot.slane %v1445, %v1458
          %v1460 = vcombine.low %v1437, %v1439
          %v1461 = vcombine.high %v1437, %v1439
          %v1463 = vunpack.c.l.s4 1983009808
          %v1464 = vunpack.c.0.s8 %v1463
          %v1465 = vlaneseq
          %v1466 = vshrl.u32 %v1465, 7
          %v1467 = vsub.s32 %v1464, %v1466
          %v1468 = vrot.slane %v1460, %v1467
          %v1470 = vunpack.c.l.s4 1983009808
          %v1471 = vunpack.c.0.s8 %v1470
          %v1472 = vlaneseq
          %v1473 = vshrl.u32 %v1472, 7
          %v1474 = vsub.s32 %v1471, %v1473
          %v1475 = vrot.slane %v1461, %v1474
          %v1476 = vcombine.low %v1452, %v1468
          %v1477 = vcombine.high %v1452, %v1468
          %v1479 = vunpack.c.l.s4 1934713408
          %v1480 = vunpack.c.0.s8 %v1479
          %v1481 = vlaneseq
          %v1482 = vshrl.u32 %v1481, 7
          %v1483 = vsub.s32 %v1480, %v1482
          %v1484 = vrot.slane %v1476, %v1483
          %v1486 = vunpack.c.l.s4 1934713408
          %v1487 = vunpack.c.0.s8 %v1486
          %v1488 = vlaneseq
          %v1489 = vshrl.u32 %v1488, 7
          %v1490 = vsub.s32 %v1487, %v1489
          %v1491 = vrot.slane %v1477, %v1490
          %v1492 = vcombine.low %v1459, %v1475
          %v1494 = vunpack.c.l.s4 1934713408
          %v1495 = vunpack.c.0.s8 %v1494
          %v1496 = vlaneseq
          %v1497 = vshrl.u32 %v1496, 7
          %v1498 = vsub.s32 %v1495, %v1497
          %v1499 = vrot.slane %v1492, %v1498
          %v1500 = vcombine.high %v1484, 0.0
          %v1501 = vcombine.high %v1491, 0.0
          %v1502 = vcombine.high %v1499, 0.0
          %1504 = vrot.lane.b32.xlu0 %v1500, 14
          %v1505 = vpop.permute.xlu0 %1504
          %1508 = vrot.lane.b32.xlu0 %v1491, 28
          %v1509 = vpop.permute.xlu0 %1508
          %1512 = vrot.lane.b32.xlu0 %v1501, 42
          %v1513 = vpop.permute.xlu0 %1512
          %1516 = vrot.lane.b32.xlu0 %v1499, 56
          %v1517 = vpop.permute.xlu0 %1516
          %1520 = vrot.lane.b32.xlu0 %v1502, 70
          %v1521 = vpop.permute.xlu0 %1520
          %v1523 = vsel %vm348, %v1484, %v1505
          %v1524 = vsel %vm350, %v1523, %v1509
          %v1525 = vsel %vm352, %v1524, %v1513
          %v1526 = vsel %vm354, %v1525, %v1517
          %v1527 = vsel %vm356, %v1526, %v1521
          %v1529 = vrot.slane %v1527, 4
          %1531 = vst.msk [vmem:[#allocation2 + $0x18] sm:$0xf0] %vm463, %v1529
          %1532 = vrot.lane.b32.xlu0 %v1436, 127
          %v1533 = vpop.permute.xlu0 %1532
          %1534 = vrot.lane.b32.xlu0 %v1437, 127
          %v1535 = vpop.permute.xlu0 %1534
          %1536 = vrot.lane.b32.xlu0 %v1438, 127
          %v1537 = vpop.permute.xlu0 %1536
          %1538 = vrot.lane.b32.xlu0 %v1439, 127
          %v1539 = vpop.permute.xlu0 %1538
          %v1544 = vcombine.low %v1533, %v1537
          %v1545 = vcombine.high %v1533, %v1537
          %v1547 = vunpack.c.l.s4 1983009808
          %v1548 = vunpack.c.0.s8 %v1547
          %v1549 = vlaneseq
          %v1550 = vshrl.u32 %v1549, 7
          %v1551 = vsub.s32 %v1548, %v1550
          %v1552 = vrot.slane %v1544, %v1551
          %v1554 = vunpack.c.l.s4 1983009808
          %v1555 = vunpack.c.0.s8 %v1554
          %v1556 = vlaneseq
          %v1557 = vshrl.u32 %v1556, 7
          %v1558 = vsub.s32 %v1555, %v1557
          %v1559 = vrot.slane %v1545, %v1558
          %v1560 = vcombine.low %v1535, %v1539
          %v1561 = vcombine.high %v1535, %v1539
          %v1563 = vunpack.c.l.s4 1983009808
          %v1564 = vunpack.c.0.s8 %v1563
          %v1565 = vlaneseq
          %v1566 = vshrl.u32 %v1565, 7
          %v1567 = vsub.s32 %v1564, %v1566
          %v1568 = vrot.slane %v1560, %v1567
          %v1570 = vunpack.c.l.s4 1983009808
          %v1571 = vunpack.c.0.s8 %v1570
          %v1572 = vlaneseq
          %v1573 = vshrl.u32 %v1572, 7
          %v1574 = vsub.s32 %v1571, %v1573
          %v1575 = vrot.slane %v1561, %v1574
          %v1576 = vcombine.low %v1552, %v1568
          %v1577 = vcombine.high %v1552, %v1568
          %v1579 = vunpack.c.l.s4 1934713408
          %v1580 = vunpack.c.0.s8 %v1579
          %v1581 = vlaneseq
          %v1582 = vshrl.u32 %v1581, 7
          %v1583 = vsub.s32 %v1580, %v1582
          %v1584 = vrot.slane %v1576, %v1583
          %v1586 = vunpack.c.l.s4 1934713408
          %v1587 = vunpack.c.0.s8 %v1586
          %v1588 = vlaneseq
          %v1589 = vshrl.u32 %v1588, 7
          %v1590 = vsub.s32 %v1587, %v1589
          %v1591 = vrot.slane %v1577, %v1590
          %v1592 = vcombine.low %v1559, %v1575
          %v1594 = vunpack.c.l.s4 1934713408
          %v1595 = vunpack.c.0.s8 %v1594
          %v1596 = vlaneseq
          %v1597 = vshrl.u32 %v1596, 7
          %v1598 = vsub.s32 %v1595, %v1597
          %v1599 = vrot.slane %v1592, %v1598
          %v1600 = vcombine.high %v1584, 0.0
          %v1601 = vcombine.high %v1591, 0.0
          %v1602 = vcombine.high %v1599, 0.0
          %1604 = vrot.lane.b32.xlu0 %v1600, 14
          %v1605 = vpop.permute.xlu0 %1604
          %1608 = vrot.lane.b32.xlu0 %v1591, 28
          %v1609 = vpop.permute.xlu0 %1608
          %1612 = vrot.lane.b32.xlu0 %v1601, 42
          %v1613 = vpop.permute.xlu0 %1612
          %1616 = vrot.lane.b32.xlu0 %v1599, 56
          %v1617 = vpop.permute.xlu0 %1616
          %1620 = vrot.lane.b32.xlu0 %v1602, 70
          %v1621 = vpop.permute.xlu0 %1620
          %v1623 = vsel %vm348, %v1584, %v1605
          %v1624 = vsel %vm350, %v1623, %v1609
          %v1625 = vsel %vm352, %v1624, %v1613
          %v1626 = vsel %vm354, %v1625, %v1617
          %v1627 = vsel %vm356, %v1626, %v1621
          %1628 = vst.msk [vmem:[#allocation2 + $0x28] sm:$0xf] %vm358, %v1627
          %1629 = vrot.lane.b32.xlu0 %v1436, 126
          %v1630 = vpop.permute.xlu0 %1629
          %1631 = vrot.lane.b32.xlu0 %v1437, 126
          %v1632 = vpop.permute.xlu0 %1631
          %1633 = vrot.lane.b32.xlu0 %v1438, 126
          %v1634 = vpop.permute.xlu0 %1633
          %1635 = vrot.lane.b32.xlu0 %v1439, 126
          %v1636 = vpop.permute.xlu0 %1635
          %v1641 = vcombine.low %v1630, %v1634
          %v1642 = vcombine.high %v1630, %v1634
          %v1644 = vunpack.c.l.s4 1983009808
          %v1645 = vunpack.c.0.s8 %v1644
          %v1646 = vlaneseq
          %v1647 = vshrl.u32 %v1646, 7
          %v1648 = vsub.s32 %v1645, %v1647
          %v1649 = vrot.slane %v1641, %v1648
          %v1651 = vunpack.c.l.s4 1983009808
          %v1652 = vunpack.c.0.s8 %v1651
          %v1653 = vlaneseq
          %v1654 = vshrl.u32 %v1653, 7
          %v1655 = vsub.s32 %v1652, %v1654
          %v1656 = vrot.slane %v1642, %v1655
          %v1657 = vcombine.low %v1632, %v1636
          %v1658 = vcombine.high %v1632, %v1636
          %v1660 = vunpack.c.l.s4 1983009808
          %v1661 = vunpack.c.0.s8 %v1660
          %v1662 = vlaneseq
          %v1663 = vshrl.u32 %v1662, 7
          %v1664 = vsub.s32 %v1661, %v1663
          %v1665 = vrot.slane %v1657, %v1664
          %v1667 = vunpack.c.l.s4 1983009808
          %v1668 = vunpack.c.0.s8 %v1667
          %v1669 = vlaneseq
          %v1670 = vshrl.u32 %v1669, 7
          %v1671 = vsub.s32 %v1668, %v1670
          %v1672 = vrot.slane %v1658, %v1671
          %v1673 = vcombine.low %v1649, %v1665
          %v1674 = vcombine.high %v1649, %v1665
          %v1676 = vunpack.c.l.s4 1934713408
          %v1677 = vunpack.c.0.s8 %v1676
          %v1678 = vlaneseq
          %v1679 = vshrl.u32 %v1678, 7
          %v1680 = vsub.s32 %v1677, %v1679
          %v1681 = vrot.slane %v1673, %v1680
          %v1683 = vunpack.c.l.s4 1934713408
          %v1684 = vunpack.c.0.s8 %v1683
          %v1685 = vlaneseq
          %v1686 = vshrl.u32 %v1685, 7
          %v1687 = vsub.s32 %v1684, %v1686
          %v1688 = vrot.slane %v1674, %v1687
          %v1689 = vcombine.low %v1656, %v1672
          %v1691 = vunpack.c.l.s4 1934713408
          %v1692 = vunpack.c.0.s8 %v1691
          %v1693 = vlaneseq
          %v1694 = vshrl.u32 %v1693, 7
          %v1695 = vsub.s32 %v1692, %v1694
          %v1696 = vrot.slane %v1689, %v1695
          %v1697 = vcombine.high %v1681, 0.0
          %v1698 = vcombine.high %v1688, 0.0
          %v1699 = vcombine.high %v1696, 0.0
          %1701 = vrot.lane.b32.xlu0 %v1697, 14
          %v1702 = vpop.permute.xlu0 %1701
          %1705 = vrot.lane.b32.xlu0 %v1688, 28
          %v1706 = vpop.permute.xlu0 %1705
          %1709 = vrot.lane.b32.xlu0 %v1698, 42
          %v1710 = vpop.permute.xlu0 %1709
          %1713 = vrot.lane.b32.xlu0 %v1696, 56
          %v1714 = vpop.permute.xlu0 %1713
          %1717 = vrot.lane.b32.xlu0 %v1699, 70
          %v1718 = vpop.permute.xlu0 %1717
          %v1720 = vsel %vm348, %v1681, %v1702
          %v1721 = vsel %vm350, %v1720, %v1706
          %v1722 = vsel %vm352, %v1721, %v1710
          %v1723 = vsel %vm354, %v1722, %v1714
          %v1724 = vsel %vm356, %v1723, %v1718
          %v1726 = vrot.slane %v1724, 4
          %1728 = vst.msk [vmem:[#allocation2 + $0x28] sm:$0xf0] %vm463, %v1726
          %v1729 = vrot.slane %v1146, 2
          %v1730 = vrot.slane %v1147, 2
          %v1731 = vrot.slane %v1148, 2
          %v1732 = vrot.slane %v1149, 2
          %v1737 = vcombine.low %v1729, %v1731
          %v1738 = vcombine.high %v1729, %v1731
          %v1740 = vunpack.c.l.s4 1983009808
          %v1741 = vunpack.c.0.s8 %v1740
          %v1742 = vlaneseq
          %v1743 = vshrl.u32 %v1742, 7
          %v1744 = vsub.s32 %v1741, %v1743
          %v1745 = vrot.slane %v1737, %v1744
          %v1747 = vunpack.c.l.s4 1983009808
          %v1748 = vunpack.c.0.s8 %v1747
          %v1749 = vlaneseq
          %v1750 = vshrl.u32 %v1749, 7
          %v1751 = vsub.s32 %v1748, %v1750
          %v1752 = vrot.slane %v1738, %v1751
          %v1753 = vcombine.low %v1730, %v1732
          %v1754 = vcombine.high %v1730, %v1732
          %v1756 = vunpack.c.l.s4 1983009808
          %v1757 = vunpack.c.0.s8 %v1756
          %v1758 = vlaneseq
          %v1759 = vshrl.u32 %v1758, 7
          %v1760 = vsub.s32 %v1757, %v1759
          %v1761 = vrot.slane %v1753, %v1760
          %v1763 = vunpack.c.l.s4 1983009808
          %v1764 = vunpack.c.0.s8 %v1763
          %v1765 = vlaneseq
          %v1766 = vshrl.u32 %v1765, 7
          %v1767 = vsub.s32 %v1764, %v1766
          %v1768 = vrot.slane %v1754, %v1767
          %v1769 = vcombine.low %v1745, %v1761
          %v1770 = vcombine.high %v1745, %v1761
          %v1772 = vunpack.c.l.s4 1934713408
          %v1773 = vunpack.c.0.s8 %v1772
          %v1774 = vlaneseq
          %v1775 = vshrl.u32 %v1774, 7
          %v1776 = vsub.s32 %v1773, %v1775
          %v1777 = vrot.slane %v1769, %v1776
          %v1779 = vunpack.c.l.s4 1934713408
          %v1780 = vunpack.c.0.s8 %v1779
          %v1781 = vlaneseq
          %v1782 = vshrl.u32 %v1781, 7
          %v1783 = vsub.s32 %v1780, %v1782
          %v1784 = vrot.slane %v1770, %v1783
          %v1785 = vcombine.low %v1752, %v1768
          %v1787 = vunpack.c.l.s4 1934713408
          %v1788 = vunpack.c.0.s8 %v1787
          %v1789 = vlaneseq
          %v1790 = vshrl.u32 %v1789, 7
          %v1791 = vsub.s32 %v1788, %v1790
          %v1792 = vrot.slane %v1785, %v1791
          %v1793 = vcombine.high %v1777, 0.0
          %v1794 = vcombine.high %v1784, 0.0
          %v1795 = vcombine.high %v1792, 0.0
          %1797 = vrot.lane.b32.xlu0 %v1793, 14
          %v1798 = vpop.permute.xlu0 %1797
          %1801 = vrot.lane.b32.xlu0 %v1784, 28
          %v1802 = vpop.permute.xlu0 %1801
          %1805 = vrot.lane.b32.xlu0 %v1794, 42
          %v1806 = vpop.permute.xlu0 %1805
          %1809 = vrot.lane.b32.xlu0 %v1792, 56
          %v1810 = vpop.permute.xlu0 %1809
          %1813 = vrot.lane.b32.xlu0 %v1795, 70
          %v1814 = vpop.permute.xlu0 %1813
          %v1816 = vsel %vm348, %v1777, %v1798
          %v1817 = vsel %vm350, %v1816, %v1802
          %v1818 = vsel %vm352, %v1817, %v1806
          %v1819 = vsel %vm354, %v1818, %v1810
          %v1820 = vsel %vm356, %v1819, %v1814
          %1821 = vst.msk [vmem:[#allocation2 + $0x38] sm:$0xf] %vm358, %v1820
          %1822 = vrot.lane.b32.xlu0 %v1729, 127
          %v1823 = vpop.permute.xlu0 %1822
          %1824 = vrot.lane.b32.xlu0 %v1730, 127
          %v1825 = vpop.permute.xlu0 %1824
          %1826 = vrot.lane.b32.xlu0 %v1731, 127
          %v1827 = vpop.permute.xlu0 %1826
          %1828 = vrot.lane.b32.xlu0 %v1732, 127
          %v1829 = vpop.permute.xlu0 %1828
          %v1834 = vcombine.low %v1823, %v1827
          %v1835 = vcombine.high %v1823, %v1827
          %v1837 = vunpack.c.l.s4 1983009808
          %v1838 = vunpack.c.0.s8 %v1837
          %v1839 = vlaneseq
          %v1840 = vshrl.u32 %v1839, 7
          %v1841 = vsub.s32 %v1838, %v1840
          %v1842 = vrot.slane %v1834, %v1841
          %v1844 = vunpack.c.l.s4 1983009808
          %v1845 = vunpack.c.0.s8 %v1844
          %v1846 = vlaneseq
          %v1847 = vshrl.u32 %v1846, 7
          %v1848 = vsub.s32 %v1845, %v1847
          %v1849 = vrot.slane %v1835, %v1848
          %v1850 = vcombine.low %v1825, %v1829
          %v1851 = vcombine.high %v1825, %v1829
          %v1853 = vunpack.c.l.s4 1983009808
          %v1854 = vunpack.c.0.s8 %v1853
          %v1855 = vlaneseq
          %v1856 = vshrl.u32 %v1855, 7
          %v1857 = vsub.s32 %v1854, %v1856
          %v1858 = vrot.slane %v1850, %v1857
          %v1860 = vunpack.c.l.s4 1983009808
          %v1861 = vunpack.c.0.s8 %v1860
          %v1862 = vlaneseq
          %v1863 = vshrl.u32 %v1862, 7
          %v1864 = vsub.s32 %v1861, %v1863
          %v1865 = vrot.slane %v1851, %v1864
          %v1866 = vcombine.low %v1842, %v1858
          %v1867 = vcombine.high %v1842, %v1858
          %v1869 = vunpack.c.l.s4 1934713408
          %v1870 = vunpack.c.0.s8 %v1869
          %v1871 = vlaneseq
          %v1872 = vshrl.u32 %v1871, 7
          %v1873 = vsub.s32 %v1870, %v1872
          %v1874 = vrot.slane %v1866, %v1873
          %v1876 = vunpack.c.l.s4 1934713408
          %v1877 = vunpack.c.0.s8 %v1876
          %v1878 = vlaneseq
          %v1879 = vshrl.u32 %v1878, 7
          %v1880 = vsub.s32 %v1877, %v1879
          %v1881 = vrot.slane %v1867, %v1880
          %v1882 = vcombine.low %v1849, %v1865
          %v1884 = vunpack.c.l.s4 1934713408
          %v1885 = vunpack.c.0.s8 %v1884
          %v1886 = vlaneseq
          %v1887 = vshrl.u32 %v1886, 7
          %v1888 = vsub.s32 %v1885, %v1887
          %v1889 = vrot.slane %v1882, %v1888
          %v1890 = vcombine.high %v1874, 0.0
          %v1891 = vcombine.high %v1881, 0.0
          %v1892 = vcombine.high %v1889, 0.0
          %1894 = vrot.lane.b32.xlu0 %v1890, 14
          %v1895 = vpop.permute.xlu0 %1894
          %1898 = vrot.lane.b32.xlu0 %v1881, 28
          %v1899 = vpop.permute.xlu0 %1898
          %1902 = vrot.lane.b32.xlu0 %v1891, 42
          %v1903 = vpop.permute.xlu0 %1902
          %1906 = vrot.lane.b32.xlu0 %v1889, 56
          %v1907 = vpop.permute.xlu0 %1906
          %1910 = vrot.lane.b32.xlu0 %v1892, 70
          %v1911 = vpop.permute.xlu0 %1910
          %v1913 = vsel %vm348, %v1874, %v1895
          %v1914 = vsel %vm350, %v1913, %v1899
          %v1915 = vsel %vm352, %v1914, %v1903
          %v1916 = vsel %vm354, %v1915, %v1907
          %v1917 = vsel %vm356, %v1916, %v1911
          %v1919 = vrot.slane %v1917, 4
          %1921 = vst.msk [vmem:[#allocation2 + $0x38] sm:$0xf0] %vm463, %v1919
          %1922 = vrot.lane.b32.xlu0 %v1729, 126
          %v1923 = vpop.permute.xlu0 %1922
          %1924 = vrot.lane.b32.xlu0 %v1730, 126
          %v1925 = vpop.permute.xlu0 %1924
          %1926 = vrot.lane.b32.xlu0 %v1731, 126
          %v1927 = vpop.permute.xlu0 %1926
          %1928 = vrot.lane.b32.xlu0 %v1732, 126
          %v1929 = vpop.permute.xlu0 %1928
          %v1934 = vcombine.low %v1923, %v1927
          %v1935 = vcombine.high %v1923, %v1927
          %v1937 = vunpack.c.l.s4 1983009808
          %v1938 = vunpack.c.0.s8 %v1937
          %v1939 = vlaneseq
          %v1940 = vshrl.u32 %v1939, 7
          %v1941 = vsub.s32 %v1938, %v1940
          %v1942 = vrot.slane %v1934, %v1941
          %v1944 = vunpack.c.l.s4 1983009808
          %v1945 = vunpack.c.0.s8 %v1944
          %v1946 = vlaneseq
          %v1947 = vshrl.u32 %v1946, 7
          %v1948 = vsub.s32 %v1945, %v1947
          %v1949 = vrot.slane %v1935, %v1948
          %v1950 = vcombine.low %v1925, %v1929
          %v1951 = vcombine.high %v1925, %v1929
          %v1953 = vunpack.c.l.s4 1983009808
          %v1954 = vunpack.c.0.s8 %v1953
          %v1955 = vlaneseq
          %v1956 = vshrl.u32 %v1955, 7
          %v1957 = vsub.s32 %v1954, %v1956
          %v1958 = vrot.slane %v1950, %v1957
          %v1960 = vunpack.c.l.s4 1983009808
          %v1961 = vunpack.c.0.s8 %v1960
          %v1962 = vlaneseq
          %v1963 = vshrl.u32 %v1962, 7
          %v1964 = vsub.s32 %v1961, %v1963
          %v1965 = vrot.slane %v1951, %v1964
          %v1966 = vcombine.low %v1942, %v1958
          %v1967 = vcombine.high %v1942, %v1958
          %v1969 = vunpack.c.l.s4 1934713408
          %v1970 = vunpack.c.0.s8 %v1969
          %v1971 = vlaneseq
          %v1972 = vshrl.u32 %v1971, 7
          %v1973 = vsub.s32 %v1970, %v1972
          %v1974 = vrot.slane %v1966, %v1973
          %v1976 = vunpack.c.l.s4 1934713408
          %v1977 = vunpack.c.0.s8 %v1976
          %v1978 = vlaneseq
          %v1979 = vshrl.u32 %v1978, 7
          %v1980 = vsub.s32 %v1977, %v1979
          %v1981 = vrot.slane %v1967, %v1980
          %v1982 = vcombine.low %v1949, %v1965
          %v1984 = vunpack.c.l.s4 1934713408
          %v1985 = vunpack.c.0.s8 %v1984
          %v1986 = vlaneseq
          %v1987 = vshrl.u32 %v1986, 7
          %v1988 = vsub.s32 %v1985, %v1987
          %v1989 = vrot.slane %v1982, %v1988
          %v1990 = vcombine.high %v1974, 0.0
          %v1991 = vcombine.high %v1981, 0.0
          %v1992 = vcombine.high %v1989, 0.0
          %1994 = vrot.lane.b32.xlu0 %v1990, 14
          %v1995 = vpop.permute.xlu0 %1994
          %1998 = vrot.lane.b32.xlu0 %v1981, 28
          %v1999 = vpop.permute.xlu0 %1998
          %2002 = vrot.lane.b32.xlu0 %v1991, 42
          %v2003 = vpop.permute.xlu0 %2002
          %2006 = vrot.lane.b32.xlu0 %v1989, 56
          %v2007 = vpop.permute.xlu0 %2006
          %2010 = vrot.lane.b32.xlu0 %v1992, 70
          %v2011 = vpop.permute.xlu0 %2010
          %v2013 = vsel %vm348, %v1974, %v1995
          %v2014 = vsel %vm350, %v2013, %v1999
          %v2015 = vsel %vm352, %v2014, %v2003
          %v2016 = vsel %vm354, %v2015, %v2007
          %v2017 = vsel %vm356, %v2016, %v2011
          %2018 = vst.msk [vmem:[#allocation2 + $0x48] sm:$0xf] %vm358, %v2017
        $region40: #{tpu_custom_call.1} parent=31 // pred_fallthru
          _
        %v2019 = vld [vmem:[%s241] sm:$0xff]
        %v2020 = vld [vmem:[%s241 + $0x8] sm:$0xff]
        %v2021 = vld [vmem:[%s241 + $0x10] sm:$0xff]
        %v2022 = vld [vmem:[%s241 + $0x18] sm:$0xff]
        %v2023 = vld [vmem:[#allocation2] sm:$0xff]
        %v2024 = vld [vmem:[#allocation2 + $0x8] sm:$0xff]
        %v2025 = vld [vmem:[#allocation2 + $0x10] sm:$0xff]
        %v2026 = vld [vmem:[#allocation2 + $0x18] sm:$0xff]
        %v2027 = vld [vmem:[#allocation2 + $0x20] sm:$0xff]
        %v2028 = vld [vmem:[#allocation2 + $0x28] sm:$0xff]
        %v2029 = vld [vmem:[#allocation2 + $0x30] sm:$0xff]
        %v2030 = vld [vmem:[#allocation2 + $0x38] sm:$0xff]
        %v2031 = vld [vmem:[#allocation2 + $0x40] sm:$0xf]
        %v2032 = vld [vmem:[#allocation2 + $0x48] sm:$0xf]
        %vm2033 = vcmask 293888
        %v2035 = vsel %vm2033, %v2019, 0
        %v2038 = vsel %vm2033, %v2020, 0
        %v2041 = vsel %vm2033, %v2021, 0
        %v2044 = vsel %vm2033, %v2022, 0
        %vm2046 = vcmask 1043456
        %v2048 = vsel %vm2046, %v2031, 0
        %v2051 = vsel %vm2046, %v2032, 0
        %2053 = vmatprep.subr.mxu0 0.0
        %2054 = vmatpush1.msra.mxu0 0.0
        %2055 = vmatprep.subr.mxu0 0.0
        %2056 = vmatpush1.msra.mxu0 0.0
        %2057 = vmatprep.subr.mxu0 0.0
        %2058 = vmatpush1.msra.mxu0 0.0
        %2059 = vmatprep.subr.mxu0 0.0
        %2060 = vmatpush1.msra.mxu0 0.0
        %2061 = vmatprep.subr.mxu0 0.0
        %2062 = vmatpush1.msra.mxu0 0.0
        %2063 = vmatprep.subr.mxu0 0.0
        %2064 = vmatpush1.msra.mxu0 0.0
        %2065 = vmatprep.subr.mxu0 0.0
        %2066 = vmatpush1.msra.mxu0 0.0
        %2067 = vmatprep.subr.mxu0 0.0
        %2068 = vmatpush1.msra.mxu0 0.0
        %2069 = vmatprep.subr.mxu0 0.0
        %2070 = vmatpush1.msra.mxu0 0.0
        %2071 = vmatprep.subr.mxu0 0.0
        %2072 = vmatpush1.msra.mxu0 0.0
        %2073 = vmatprep.subr.mxu0 0.0
        %2074 = vmatpush1.msra.mxu0 0.0
        %2075 = vmatprep.subr.mxu0 %v2051
        %2076 = vmatpush1.msra.mxu0 %v2048
        %2077 = vmatprep.subr.mxu0 %v2030
        %2078 = vmatpush1.msra.mxu0 %v2029
        %2079 = vmatprep.subr.mxu0 %v2028
        %2080 = vmatpush1.msra.mxu0 %v2027
        %2081 = vmatprep.subr.mxu0 %v2026
        %2082 = vmatpush1.msra.mxu0 %v2025
        %2083 = vmatprep.subr.mxu0 %v2024
        %2084 = vmatpush1.msra.mxu0 %v2023
        %2085 = vmatprep.subr.mxu0 0.0
        %2086 = vmatpush2.msra.mxu0 0.0
        %2087 = vmatprep.subr.mxu0 0.0
        %2088 = vmatpush2.msra.mxu0 0.0
        %2089 = vmatprep.subr.mxu0 0.0
        %2090 = vmatpush2.msra.mxu0 0.0
        %2091 = vmatprep.subr.mxu0 0.0
        %2092 = vmatpush2.msra.mxu0 0.0
        %2093 = vmatprep.subr.mxu0 0.0
        %2094 = vmatpush2.msra.mxu0 0.0
        %2095 = vmatprep.subr.mxu0 0.0
        %2096 = vmatpush2.msra.mxu0 0.0
        %2097 = vmatprep.subr.mxu0 0.0
        %2098 = vmatpush2.msra.mxu0 0.0
        %2099 = vmatprep.subr.mxu0 0.0
        %2100 = vmatpush2.msra.mxu0 0.0
        %2101 = vmatprep.subr.mxu0 0.0
        %2102 = vmatpush2.msra.mxu0 0.0
        %2103 = vmatprep.subr.mxu0 0.0
        %2104 = vmatpush2.msra.mxu0 0.0
        %2105 = vmatprep.subr.mxu0 0.0
        %2106 = vmatpush2.msra.mxu0 0.0
        %2107 = vmatprep.subr.mxu0 0.0
        %2108 = vmatpush2.msra.mxu0 0.0
        %2109 = vmatprep.subr.mxu0 0.0
        %2110 = vmatpush2.msra.mxu0 0.0
        %2111 = vmatprep.subr.mxu0 0.0
        %2112 = vmatpush2.msra.mxu0 0.0
        %2113 = vmatprep.subr.mxu0 0.0
        %2114 = vmatpush2.msra.mxu0 0.0
        %2115 = vmatprep.subr.mxu0 0.0
        %2116 = vmatpush2.msra.mxu0 0.0
        %2117 = vmatprep.mubr.f32.mxu0 0.0
        %2118 = vmatmul.mubr.f32.gmra.mxu0 %v2035
        %v2119 = vpop.f32.mrf.mxu0
        %v2120 = vadd.f32 0.0, %v2119
        %v2121 = vpop.f32.mrf.mxu0
        %v2122 = vadd.f32 0.0, %v2121
        %2123 = vmatprep.mubr.f32.mxu0 0.0
        %2124 = vmatmul.mubr.f32.gmra.mxu0 %v2038
        %v2125 = vpop.f32.mrf.mxu0
        %v2126 = vadd.f32 0.0, %v2125
        %v2127 = vpop.f32.mrf.mxu0
        %v2128 = vadd.f32 0.0, %v2127
        %2129 = vmatprep.mubr.f32.mxu0 0.0
        %2130 = vmatmul.mubr.f32.gmra.mxu0 %v2041
        %v2131 = vpop.f32.mrf.mxu0
        %v2132 = vadd.f32 0.0, %v2131
        %v2133 = vpop.f32.mrf.mxu0
        %v2134 = vadd.f32 0.0, %v2133
        %2135 = vmatprep.mubr.f32.mxu0 0.0
        %2136 = vmatmul.mubr.f32.gmra.mxu0 %v2044
        %v2137 = vpop.f32.mrf.mxu0
        %v2138 = vadd.f32 0.0, %v2137
        %v2139 = vpop.f32.mrf.mxu0
        %v2140 = vadd.f32 0.0, %v2139
        %2141 = vdwg.mxu0
        %v2142 = vld [vmem:[%s247] sm:$0xff]
        %v2143 = vld [vmem:[%s247 + $0x8] sm:$0xff]
        %v2144 = vld [vmem:[%s247 + $0x10] sm:$0xff]
        %v2145 = vld [vmem:[%s247 + $0x18] sm:$0xff]
        %2150 = vrot.lane.b32.xlu0 %v2142, 14
        %v2151 = vpop.permute.xlu0 %2150
        %2152 = vrot.lane.b32.xlu0 %v2143, 14
        %v2153 = vpop.permute.xlu0 %2152
        %2154 = vrot.lane.b32.xlu0 %v2144, 14
        %v2155 = vpop.permute.xlu0 %2154
        %2156 = vrot.lane.b32.xlu0 %v2145, 14
        %v2157 = vpop.permute.xlu0 %2156
        %2162 = vrot.lane.b32.xlu0 %v2142, 28
        %v2163 = vpop.permute.xlu0 %2162
        %2164 = vrot.lane.b32.xlu0 %v2143, 28
        %v2165 = vpop.permute.xlu0 %2164
        %2166 = vrot.lane.b32.xlu0 %v2144, 28
        %v2167 = vpop.permute.xlu0 %2166
        %2168 = vrot.lane.b32.xlu0 %v2145, 28
        %v2169 = vpop.permute.xlu0 %2168
        %2174 = vrot.lane.b32.xlu0 %v2142, 42
        %v2175 = vpop.permute.xlu0 %2174
        %2176 = vrot.lane.b32.xlu0 %v2143, 42
        %v2177 = vpop.permute.xlu0 %2176
        %2178 = vrot.lane.b32.xlu0 %v2144, 42
        %v2179 = vpop.permute.xlu0 %2178
        %2180 = vrot.lane.b32.xlu0 %v2145, 42
        %v2181 = vpop.permute.xlu0 %2180
        %2186 = vrot.lane.b32.xlu0 %v2142, 56
        %v2187 = vpop.permute.xlu0 %2186
        %2188 = vrot.lane.b32.xlu0 %v2143, 56
        %v2189 = vpop.permute.xlu0 %2188
        %2190 = vrot.lane.b32.xlu0 %v2144, 56
        %v2191 = vpop.permute.xlu0 %2190
        %2192 = vrot.lane.b32.xlu0 %v2145, 56
        %v2193 = vpop.permute.xlu0 %2192
        %2198 = vrot.lane.b32.xlu0 %v2142, 70
        %v2199 = vpop.permute.xlu0 %2198
        %2200 = vrot.lane.b32.xlu0 %v2143, 70
        %v2201 = vpop.permute.xlu0 %2200
        %2202 = vrot.lane.b32.xlu0 %v2144, 70
        %v2203 = vpop.permute.xlu0 %2202
        %2204 = vrot.lane.b32.xlu0 %v2145, 70
        %v2205 = vpop.permute.xlu0 %2204
        %vm2210 = vcmask 113664
        %v2211 = vsel %vm2210, %v2142, %v2151
        %v2212 = vsel %vm2210, %v2143, %v2153
        %v2213 = vsel %vm2210, %v2144, %v2155
        %v2214 = vsel %vm2210, %v2145, %v2157
        %vm2215 = vcmask 228352
        %v2216 = vsel %vm2215, %v2211, %v2163
        %v2217 = vsel %vm2215, %v2212, %v2165
        %v2218 = vsel %vm2215, %v2213, %v2167
        %v2219 = vsel %vm2215, %v2214, %v2169
        %vm2220 = vcmask 343040
        %v2221 = vsel %vm2220, %v2216, %v2175
        %v2222 = vsel %vm2220, %v2217, %v2177
        %v2223 = vsel %vm2220, %v2218, %v2179
        %v2224 = vsel %vm2220, %v2219, %v2181
        %vm2225 = vcmask 457728
        %v2226 = vsel %vm2225, %v2221, %v2187
        %v2227 = vsel %vm2225, %v2222, %v2189
        %v2228 = vsel %vm2225, %v2223, %v2191
        %v2229 = vsel %vm2225, %v2224, %v2193
        %vm2230 = vcmask 572416
        %v2231 = vsel %vm2230, %v2226, %v2199
        %v2232 = vsel %vm2230, %v2227, %v2201
        %v2233 = vsel %vm2230, %v2228, %v2203
        %v2234 = vsel %vm2230, %v2229, %v2205
        %vm2235 = vcmask 687104
        %v2236 = vsel %vm2235, %v2231, 0.0
        %v2237 = vsel %vm2235, %v2232, 0.0
        %v2238 = vsel %vm2235, %v2233, 0.0
        %v2239 = vsel %vm2235, %v2234, 0.0
        %v2240 = vadd.f32 %v2120, %v2236
        %v2241 = vadd.f32 %v2126, %v2237
        %v2242 = vadd.f32 %v2132, %v2238
        %v2243 = vadd.f32 %v2138, %v2239
        %2244 = vst [vmem:[%s235] sm:$0xff] %v2240
        %2245 = vst [vmem:[%s235 + $0x8] sm:$0xff] %v2241
        %2246 = vst [vmem:[%s235 + $0x10] sm:$0xff] %v2242
        %2247 = vst [vmem:[%s235 + $0x18] sm:$0xff] %v2243
        %v2248 = vadd.f32 %v2122, %v2236
        %v2249 = vadd.f32 %v2128, %v2237
        %v2250 = vadd.f32 %v2134, %v2238
        %v2251 = vadd.f32 %v2140, %v2239
        %s2252 = scalar_lea.vmem %s235, 32 [#allocation6]
        %2253 = vst [vmem:[%s2252] sm:$0xff] %v2248
        %2254 = vst [vmem:[%s2252 + $0x8] sm:$0xff] %v2249
        %2255 = vst [vmem:[%s2252 + $0x10] sm:$0xff] %v2250
        %2256 = vst [vmem:[%s2252 + $0x18] sm:$0xff] %v2251
        %s2257 = sand.u32 %s120, 1
        %s2258 = scalar_lea.sflag [#allocation5], %s2257
        %s2259 = sand.u32 %s120, 1
        %s2260 = smul.addr %s2259, 64
        %s2261 = scalar_lea.vmem [#allocation6], %s2260
        // Predicated region
        $region41: #{tpu_custom_call.1} parent=31 // pred_check
          %p2262 = pneg %p130
        $region42: #{tpu_custom_call.1} parent=31 // pred_check_branch
          %2264 = sbr.rel (%p2262) target = $region44
        $region43: #{tpu_custom_call.1} parent=31 // pred_region
          %s2265 = smul.u32 2, %s24
          %s2266 = smul.u32 4, %s25
          %s2268 = ssub.s32 1024, 1024
          %2269 = vsyncadd %s2258, %s2268
          %s2270 = smul.addr %s2265, 4
          %s2271 = sadd.s32 %s2266, %s2270
          %s2272 = smul.addr %s2271, 128
          %s2273 = scalar_lea.hbm %s3, %s2272
          %s2274 = sshll.u32 %s2261, 4
          %s2275 = int_to_ptr.vmem [resolvable:$true] %s2274
          %2280 = dma.vmem_to_hbm [thread:$0]  %s2275, 1024, %s2273, %s2258, 128, 128, 8
        $region44: #{tpu_custom_call.1} parent=31 // pred_fallthru
          _
      $region32: #{tpu_custom_call.1} parent=5 // pred_fallthru
        _
      %p2281 = scmp.le.s32.totalorder 2, %s15
      // Predicated region
      $region45: #{tpu_custom_call.1} parent=5 // pred_check
        %p2282 = pneg %p2281
      $region46: #{tpu_custom_call.1} parent=5 // pred_check_branch
        %2284 = sbr.rel (%p2282) target = $region48
      $region47: #{tpu_custom_call.1} parent=5 // pred_region
        %s2285 = ssub.s32 %s15, 2
        // Predicated region
        $region49: #{tpu_custom_call.1} parent=47 // pred_check
          %p2286 = pneg %p136
        $region50: #{tpu_custom_call.1} parent=47 // pred_check_branch
          %2288 = sbr.rel (%p2286) target = $region52
        $region51: #{tpu_custom_call.1} parent=47 // pred_region
          %s2289 = sand.u32 %s121, 1
          %s2290 = scalar_lea.sflag [#allocation5], %s2289
          %s2291 = sand.u32 %s121, 1
          %s2292 = smul.addr %s2291, 64
          %s2293 = scalar_lea.vmem [#allocation6], %s2292
          %2294 = dma.done %s2290, 1024
        $region52: #{tpu_custom_call.1} parent=47 // pred_fallthru
          _
      $region48: #{tpu_custom_call.1} parent=5 // pred_fallthru
        _
    $region6: #{tpu_custom_call.1} parent=1 // loop_footer
      %s19 = sadd.s32 1, %s15
    $region7: #{tpu_custom_call.1} parent=1 // loop_footer_branch
      %14 = sbr.rel target = $region3
    $region8: #{tpu_custom_call.1} parent=1 // loop_exit
      _
    %2295 = vsyncpa [#allocation4], 1
    %s2296 = scalar_lea.sflag [#allocation4], 1
    %2297 = vsyncpa %s2296, 1
    %2298 = vsyncpa [#allocation5], 1
    %s2299 = scalar_lea.sflag [#allocation5], 1
    %2300 = vsyncpa %s2299, 1

</llo_original>
